<compile_context>
chip_gen: v7x
topology: tpu7x:2x2x1
jax: 0.10.0
libtpu: 0.0.40
codegen_flags: <defaults>
</compile_context>

<pallas_src>
import jax
import jax.numpy as jnp
from jax import lax
from jax.experimental import pallas as pl
from jax.experimental.pallas import tpu as pltpu


def _img_g_kernel(xp_ref, w1_ref, b1_ref, w2_ref, b2_ref, o_ref, hp_ref):
    # xp_ref: (1, 3, H+4, W+4)  input, NCHW, spatially padded by 2
    # w1_ref: (27,) SMEM        conv1 weights, [cin, kh, kw] flattened
    # b1_ref: (1,)  SMEM        conv1 bias
    # w2_ref: (27,) SMEM        conv2 weights, [cout, kh, kw] flattened
    # b2_ref: (3,)  SMEM        conv2 bias
    # o_ref:  (1, 3, H, W)      output block (NCHW)
    # hp_ref: (H+2, W+2) VMEM scratch: zero-padded LeakyReLU(conv1) output
    Hp2, Wp2 = hp_ref.shape
    H, W = Hp2 - 2, Wp2 - 2

    # ---- conv1 (3 -> 1) evaluated on the extended (H+2, W+2) domain --------
    acc1 = jnp.zeros((Hp2, Wp2), jnp.float32)
    for c in range(3):
        for kh in range(3):
            for kw in range(3):
                tap = xp_ref[0, c, kh:kh + Hp2, kw:kw + Wp2]      # (H+2, W+2)
                acc1 = acc1 + w1_ref[c * 9 + kh * 3 + kw] * tap
    acc1 = acc1 + b1_ref[0]

    # LeakyReLU(0.2)
    h1 = jnp.where(acc1 >= 0, acc1, 0.2 * acc1)

    # Keep only the valid H x W interior; the masked border becomes exactly
    # the zero padding conv2 needs (aligned full store, no offset store).
    ii = lax.broadcasted_iota(jnp.int32, (Hp2, Wp2), 0)
    jj = lax.broadcasted_iota(jnp.int32, (Hp2, Wp2), 1)
    interior = (ii >= 1) & (ii <= H) & (jj >= 1) & (jj <= W)
    hp_ref[...] = jnp.where(interior, h1, 0.0)

    # ---- conv2 (1 -> 3) ------------------------------------------------------
    # Load the 9 shifted slabs once and reuse them for all 3 output channels.
    taps = [[hp_ref[kh:kh + H, kw:kw + W] for kw in range(3)] for kh in range(3)]
    for co in range(3):
        acc2 = jnp.zeros((H, W), jnp.float32)
        for kh in range(3):
            for kw in range(3):
                acc2 = acc2 + w2_ref[co * 9 + kh * 3 + kw] * taps[kh][kw]
        o_ref[0, co] = acc2 + b2_ref[co]


def img_g_forward(x_nchw, params):
    """x_nchw: (B, 3, H, W) float32; returns (B, 3, H, W) like the PyTorch module."""
    B, C, H, W = x_nchw.shape
    assert C == 3
    # Single tiny pad of the raw input (pad=2 so conv1 can be computed on the
    # extended domain and conv2's padding handled fully in-kernel).
    xp = jnp.pad(x_nchw, ((0, 0), (0, 0), (2, 2), (2, 2)))

    smem = pl.BlockSpec(memory_space=pltpu.MemorySpace.SMEM)
    return pl.pallas_call(
        _img_g_kernel,
        out_shape=jax.ShapeDtypeStruct((B, 3, H, W), jnp.float32),
        grid_spec=pltpu.PrefetchScalarGridSpec(
            num_scalar_prefetch=0,
            grid=(B,),
            in_specs=[
                pl.BlockSpec((1, 3, H + 4, W + 4), lambda b: (b, 0, 0, 0)),
                smem,   # w1 (27,)
                smem,   # b1 (1,)
                smem,   # w2 (27,)
                smem,   # b2 (3,)
            ],
            out_specs=pl.BlockSpec((1, 3, H, W), lambda b: (b, 0, 0, 0)),
            scratch_shapes=[pltpu.VMEM((H + 2, W + 2), jnp.float32)],
        ),
        compiler_params=pltpu.CompilerParams(
            dimension_semantics=("parallel",),
        ),
    )(xp,
      params["w1"].reshape(-1),
      params["b1"].reshape(-1),
      params["w2"].reshape(-1),
      params["b2"].reshape(-1))


img_g_forward_jit = jax.jit(img_g_forward)


# ---------------- pure-JAX reference (for correctness check) ----------------
def img_g_reference(x_nchw, params):
    w1 = params["w1"][None]            # (1, 3, 3, 3) OIHW
    y = lax.conv_general_dilated(
        x_nchw, w1, window_strides=(1, 1), padding="SAME",
        dimension_numbers=("NCHW", "OIHW", "NCHW"),
        precision=lax.Precision.HIGHEST)
    y = y + params["b1"].reshape(1, 1, 1, 1)
    y = jnp.where(y >= 0, y, 0.2 * y)
    w2 = params["w2"][:, None]         # (3, 1, 3, 3) OIHW
    z = lax.conv_general_dilated(
        y, w2, window_strides=(1, 1), padding="SAME",
        dimension_numbers=("NCHW", "OIHW", "NCHW"),
        precision=lax.Precision.HIGHEST)
    return z + params["b2"].reshape(1, 3, 1, 1)


def init_params(key):
    # Deterministic synthetic init (not a checkpoint load).
    k = jax.random.split(key, 4)
    return {
        "w1": 0.1 * jax.random.normal(k[0], (3, 3, 3), jnp.float32),  # [cin, kh, kw]
        "b1": 0.1 * jax.random.normal(k[1], (1,), jnp.float32),
        "w2": 0.1 * jax.random.normal(k[2], (3, 3, 3), jnp.float32),  # [cout, kh, kw]
        "b2": 0.1 * jax.random.normal(k[3], (3,), jnp.float32),
    }


if __name__ == "__main__":
    key = jax.random.PRNGKey(0)
    kx, kp = jax.random.split(key)

    # Channels fixed at 3 by the module; keep batch/spatial small.
    B, C, H, W = 2, 3, 16, 16
    x = jax.random.normal(kx, (B, C, H, W), jnp.float32)   # NCHW like PyTorch
    params = init_params(kp)

    out = img_g_forward_jit(x, params)
    out = jax.block_until_ready(out)
    assert out.shape == (B, 3, H, W), out.shape

    ref = img_g_reference(x, params)
    assert jnp.allclose(out, ref, rtol=1e-3, atol=1e-3), (
        float(jnp.max(jnp.abs(out - ref))))

    print("KERNEL_OK")
</pallas_src>

<mosaic_0001>
module attributes {stable_mosaic.version = 11 : i64} {
  func.func @_img_g_kernel(%arg0: i32, %arg1: memref<1x3x20x20xf32, #tpu.memory_space<vmem>>, %arg2: memref<27xf32, #tpu.memory_space<smem>>, %arg3: memref<1xf32, #tpu.memory_space<smem>>, %arg4: memref<27xf32, #tpu.memory_space<smem>>, %arg5: memref<3xf32, #tpu.memory_space<smem>>, %arg6: memref<1x3x16x16xf32, #tpu.memory_space<vmem>>, %arg7: memref<18x18xf32, #tpu.memory_space<vmem>>) attributes {dimension_semantics = [#tpu.dimension_semantics<parallel>], iteration_bounds = array<i64: 2>, scalar_prefetch = 0 : i64, scratch_operands = 1 : i64, tpu.core_type = #tpu.core_type<tc>, window_params = [{transform_indices = @transform_0, window_bounds = array<i64: 1, 3, 20, 20>}, {transform_indices = @transform_1, window_bounds = array<i64: 27>}, {transform_indices = @transform_2, window_bounds = array<i64: 1>}, {transform_indices = @transform_3, window_bounds = array<i64: 27>}, {transform_indices = @transform_4, window_bounds = array<i64: 3>}, {transform_indices = @transform_5, window_bounds = array<i64: 1, 3, 16, 16>}]} {
    %cst = arith.constant 0.000000e+00 : f32
    %0 = vector.broadcast %cst : f32 to vector<18x18xf32>
    %c0 = arith.constant 0 : index
    %c0_0 = arith.constant 0 : index
    %c0_1 = arith.constant 0 : index
    %c0_2 = arith.constant 0 : index
    %1 = vector.load %arg1[%c0, %c0_0, %c0_1, %c0_2] : memref<1x3x20x20xf32, #tpu.memory_space<vmem>>, vector<1x1x18x18xf32>
    %2 = vector.shape_cast %1 : vector<1x1x18x18xf32> to vector<18x18xf32>
    %c0_3 = arith.constant 0 : index
    %3 = memref.load %arg2[%c0_3] : memref<27xf32, #tpu.memory_space<smem>>
    %4 = vector.broadcast %3 : f32 to vector<18x18xf32>
    %5 = arith.mulf %4, %2 : vector<18x18xf32>
    %6 = arith.addf %0, %5 : vector<18x18xf32>
    %c0_4 = arith.constant 0 : index
    %c0_5 = arith.constant 0 : index
    %c0_6 = arith.constant 0 : index
    %c1 = arith.constant 1 : index
    %7 = vector.load %arg1[%c0_4, %c0_5, %c0_6, %c1] : memref<1x3x20x20xf32, #tpu.memory_space<vmem>>, vector<1x1x18x18xf32>
    %8 = vector.shape_cast %7 : vector<1x1x18x18xf32> to vector<18x18xf32>
    %c1_7 = arith.constant 1 : index
    %9 = memref.load %arg2[%c1_7] : memref<27xf32, #tpu.memory_space<smem>>
    %10 = vector.broadcast %9 : f32 to vector<18x18xf32>
    %11 = arith.mulf %10, %8 : vector<18x18xf32>
    %12 = arith.addf %6, %11 : vector<18x18xf32>
    %c0_8 = arith.constant 0 : index
    %c0_9 = arith.constant 0 : index
    %c0_10 = arith.constant 0 : index
    %c2 = arith.constant 2 : index
    %13 = vector.load %arg1[%c0_8, %c0_9, %c0_10, %c2] : memref<1x3x20x20xf32, #tpu.memory_space<vmem>>, vector<1x1x18x18xf32>
    %14 = vector.shape_cast %13 : vector<1x1x18x18xf32> to vector<18x18xf32>
    %c2_11 = arith.constant 2 : index
    %15 = memref.load %arg2[%c2_11] : memref<27xf32, #tpu.memory_space<smem>>
    %16 = vector.broadcast %15 : f32 to vector<18x18xf32>
    %17 = arith.mulf %16, %14 : vector<18x18xf32>
    %18 = arith.addf %12, %17 : vector<18x18xf32>
    %c0_12 = arith.constant 0 : index
    %c0_13 = arith.constant 0 : index
    %c1_14 = arith.constant 1 : index
    %c0_15 = arith.constant 0 : index
    %19 = vector.load %arg1[%c0_12, %c0_13, %c1_14, %c0_15] : memref<1x3x20x20xf32, #tpu.memory_space<vmem>>, vector<1x1x18x18xf32>
    %20 = vector.shape_cast %19 : vector<1x1x18x18xf32> to vector<18x18xf32>
    %c3 = arith.constant 3 : index
    %21 = memref.load %arg2[%c3] : memref<27xf32, #tpu.memory_space<smem>>
    %22 = vector.broadcast %21 : f32 to vector<18x18xf32>
    %23 = arith.mulf %22, %20 : vector<18x18xf32>
    %24 = arith.addf %18, %23 : vector<18x18xf32>
    %c0_16 = arith.constant 0 : index
    %c0_17 = arith.constant 0 : index
    %c1_18 = arith.constant 1 : index
    %c1_19 = arith.constant 1 : index
    %25 = vector.load %arg1[%c0_16, %c0_17, %c1_18, %c1_19] : memref<1x3x20x20xf32, #tpu.memory_space<vmem>>, vector<1x1x18x18xf32>
    %26 = vector.shape_cast %25 : vector<1x1x18x18xf32> to vector<18x18xf32>
    %c4 = arith.constant 4 : index
    %27 = memref.load %arg2[%c4] : memref<27xf32, #tpu.memory_space<smem>>
    %28 = vector.broadcast %27 : f32 to vector<18x18xf32>
    %29 = arith.mulf %28, %26 : vector<18x18xf32>
    %30 = arith.addf %24, %29 : vector<18x18xf32>
    %c0_20 = arith.constant 0 : index
    %c0_21 = arith.constant 0 : index
    %c1_22 = arith.constant 1 : index
    %c2_23 = arith.constant 2 : index
    %31 = vector.load %arg1[%c0_20, %c0_21, %c1_22, %c2_23] : memref<1x3x20x20xf32, #tpu.memory_space<vmem>>, vector<1x1x18x18xf32>
    %32 = vector.shape_cast %31 : vector<1x1x18x18xf32> to vector<18x18xf32>
    %c5 = arith.constant 5 : index
    %33 = memref.load %arg2[%c5] : memref<27xf32, #tpu.memory_space<smem>>
    %34 = vector.broadcast %33 : f32 to vector<18x18xf32>
    %35 = arith.mulf %34, %32 : vector<18x18xf32>
    %36 = arith.addf %30, %35 : vector<18x18xf32>
    %c0_24 = arith.constant 0 : index
    %c0_25 = arith.constant 0 : index
    %c2_26 = arith.constant 2 : index
    %c0_27 = arith.constant 0 : index
    %37 = vector.load %arg1[%c0_24, %c0_25, %c2_26, %c0_27] : memref<1x3x20x20xf32, #tpu.memory_space<vmem>>, vector<1x1x18x18xf32>
    %38 = vector.shape_cast %37 : vector<1x1x18x18xf32> to vector<18x18xf32>
    %c6 = arith.constant 6 : index
    %39 = memref.load %arg2[%c6] : memref<27xf32, #tpu.memory_space<smem>>
    %40 = vector.broadcast %39 : f32 to vector<18x18xf32>
    %41 = arith.mulf %40, %38 : vector<18x18xf32>
    %42 = arith.addf %36, %41 : vector<18x18xf32>
    %c0_28 = arith.constant 0 : index
    %c0_29 = arith.constant 0 : index
    %c2_30 = arith.constant 2 : index
    %c1_31 = arith.constant 1 : index
    %43 = vector.load %arg1[%c0_28, %c0_29, %c2_30, %c1_31] : memref<1x3x20x20xf32, #tpu.memory_space<vmem>>, vector<1x1x18x18xf32>
    %44 = vector.shape_cast %43 : vector<1x1x18x18xf32> to vector<18x18xf32>
    %c7 = arith.constant 7 : index
    %45 = memref.load %arg2[%c7] : memref<27xf32, #tpu.memory_space<smem>>
    %46 = vector.broadcast %45 : f32 to vector<18x18xf32>
    %47 = arith.mulf %46, %44 : vector<18x18xf32>
    %48 = arith.addf %42, %47 : vector<18x18xf32>
    %c0_32 = arith.constant 0 : index
    %c0_33 = arith.constant 0 : index
    %c2_34 = arith.constant 2 : index
    %c2_35 = arith.constant 2 : index
    %49 = vector.load %arg1[%c0_32, %c0_33, %c2_34, %c2_35] : memref<1x3x20x20xf32, #tpu.memory_space<vmem>>, vector<1x1x18x18xf32>
    %50 = vector.shape_cast %49 : vector<1x1x18x18xf32> to vector<18x18xf32>
    %c8 = arith.constant 8 : index
    %51 = memref.load %arg2[%c8] : memref<27xf32, #tpu.memory_space<smem>>
    %52 = vector.broadcast %51 : f32 to vector<18x18xf32>
    %53 = arith.mulf %52, %50 : vector<18x18xf32>
    %54 = arith.addf %48, %53 : vector<18x18xf32>
    %c0_36 = arith.constant 0 : index
    %c1_37 = arith.constant 1 : index
    %c0_38 = arith.constant 0 : index
    %c0_39 = arith.constant 0 : index
    %55 = vector.load %arg1[%c0_36, %c1_37, %c0_38, %c0_39] : memref<1x3x20x20xf32, #tpu.memory_space<vmem>>, vector<1x1x18x18xf32>
    %56 = vector.shape_cast %55 : vector<1x1x18x18xf32> to vector<18x18xf32>
    %c9 = arith.constant 9 : index
    %57 = memref.load %arg2[%c9] : memref<27xf32, #tpu.memory_space<smem>>
    %58 = vector.broadcast %57 : f32 to vector<18x18xf32>
    %59 = arith.mulf %58, %56 : vector<18x18xf32>
    %60 = arith.addf %54, %59 : vector<18x18xf32>
    %c0_40 = arith.constant 0 : index
    %c1_41 = arith.constant 1 : index
    %c0_42 = arith.constant 0 : index
    %c1_43 = arith.constant 1 : index
    %61 = vector.load %arg1[%c0_40, %c1_41, %c0_42, %c1_43] : memref<1x3x20x20xf32, #tpu.memory_space<vmem>>, vector<1x1x18x18xf32>
    %62 = vector.shape_cast %61 : vector<1x1x18x18xf32> to vector<18x18xf32>
    %c10 = arith.constant 10 : index
    %63 = memref.load %arg2[%c10] : memref<27xf32, #tpu.memory_space<smem>>
    %64 = vector.broadcast %63 : f32 to vector<18x18xf32>
    %65 = arith.mulf %64, %62 : vector<18x18xf32>
    %66 = arith.addf %60, %65 : vector<18x18xf32>
    %c0_44 = arith.constant 0 : index
    %c1_45 = arith.constant 1 : index
    %c0_46 = arith.constant 0 : index
    %c2_47 = arith.constant 2 : index
    %67 = vector.load %arg1[%c0_44, %c1_45, %c0_46, %c2_47] : memref<1x3x20x20xf32, #tpu.memory_space<vmem>>, vector<1x1x18x18xf32>
    %68 = vector.shape_cast %67 : vector<1x1x18x18xf32> to vector<18x18xf32>
    %c11 = arith.constant 11 : index
    %69 = memref.load %arg2[%c11] : memref<27xf32, #tpu.memory_space<smem>>
    %70 = vector.broadcast %69 : f32 to vector<18x18xf32>
    %71 = arith.mulf %70, %68 : vector<18x18xf32>
    %72 = arith.addf %66, %71 : vector<18x18xf32>
    %c0_48 = arith.constant 0 : index
    %c1_49 = arith.constant 1 : index
    %c1_50 = arith.constant 1 : index
    %c0_51 = arith.constant 0 : index
    %73 = vector.load %arg1[%c0_48, %c1_49, %c1_50, %c0_51] : memref<1x3x20x20xf32, #tpu.memory_space<vmem>>, vector<1x1x18x18xf32>
    %74 = vector.shape_cast %73 : vector<1x1x18x18xf32> to vector<18x18xf32>
    %c12 = arith.constant 12 : index
    %75 = memref.load %arg2[%c12] : memref<27xf32, #tpu.memory_space<smem>>
    %76 = vector.broadcast %75 : f32 to vector<18x18xf32>
    %77 = arith.mulf %76, %74 : vector<18x18xf32>
    %78 = arith.addf %72, %77 : vector<18x18xf32>
    %c0_52 = arith.constant 0 : index
    %c1_53 = arith.constant 1 : index
    %c1_54 = arith.constant 1 : index
    %c1_55 = arith.constant 1 : index
    %79 = vector.load %arg1[%c0_52, %c1_53, %c1_54, %c1_55] : memref<1x3x20x20xf32, #tpu.memory_space<vmem>>, vector<1x1x18x18xf32>
    %80 = vector.shape_cast %79 : vector<1x1x18x18xf32> to vector<18x18xf32>
    %c13 = arith.constant 13 : index
    %81 = memref.load %arg2[%c13] : memref<27xf32, #tpu.memory_space<smem>>
    %82 = vector.broadcast %81 : f32 to vector<18x18xf32>
    %83 = arith.mulf %82, %80 : vector<18x18xf32>
    %84 = arith.addf %78, %83 : vector<18x18xf32>
    %c0_56 = arith.constant 0 : index
    %c1_57 = arith.constant 1 : index
    %c1_58 = arith.constant 1 : index
    %c2_59 = arith.constant 2 : index
    %85 = vector.load %arg1[%c0_56, %c1_57, %c1_58, %c2_59] : memref<1x3x20x20xf32, #tpu.memory_space<vmem>>, vector<1x1x18x18xf32>
    %86 = vector.shape_cast %85 : vector<1x1x18x18xf32> to vector<18x18xf32>
    %c14 = arith.constant 14 : index
    %87 = memref.load %arg2[%c14] : memref<27xf32, #tpu.memory_space<smem>>
    %88 = vector.broadcast %87 : f32 to vector<18x18xf32>
    %89 = arith.mulf %88, %86 : vector<18x18xf32>
    %90 = arith.addf %84, %89 : vector<18x18xf32>
    %c0_60 = arith.constant 0 : index
    %c1_61 = arith.constant 1 : index
    %c2_62 = arith.constant 2 : index
    %c0_63 = arith.constant 0 : index
    %91 = vector.load %arg1[%c0_60, %c1_61, %c2_62, %c0_63] : memref<1x3x20x20xf32, #tpu.memory_space<vmem>>, vector<1x1x18x18xf32>
    %92 = vector.shape_cast %91 : vector<1x1x18x18xf32> to vector<18x18xf32>
    %c15 = arith.constant 15 : index
    %93 = memref.load %arg2[%c15] : memref<27xf32, #tpu.memory_space<smem>>
    %94 = vector.broadcast %93 : f32 to vector<18x18xf32>
    %95 = arith.mulf %94, %92 : vector<18x18xf32>
    %96 = arith.addf %90, %95 : vector<18x18xf32>
    %c0_64 = arith.constant 0 : index
    %c1_65 = arith.constant 1 : index
    %c2_66 = arith.constant 2 : index
    %c1_67 = arith.constant 1 : index
    %97 = vector.load %arg1[%c0_64, %c1_65, %c2_66, %c1_67] : memref<1x3x20x20xf32, #tpu.memory_space<vmem>>, vector<1x1x18x18xf32>
    %98 = vector.shape_cast %97 : vector<1x1x18x18xf32> to vector<18x18xf32>
    %c16 = arith.constant 16 : index
    %99 = memref.load %arg2[%c16] : memref<27xf32, #tpu.memory_space<smem>>
    %100 = vector.broadcast %99 : f32 to vector<18x18xf32>
    %101 = arith.mulf %100, %98 : vector<18x18xf32>
    %102 = arith.addf %96, %101 : vector<18x18xf32>
    %c0_68 = arith.constant 0 : index
    %c1_69 = arith.constant 1 : index
    %c2_70 = arith.constant 2 : index
    %c2_71 = arith.constant 2 : index
    %103 = vector.load %arg1[%c0_68, %c1_69, %c2_70, %c2_71] : memref<1x3x20x20xf32, #tpu.memory_space<vmem>>, vector<1x1x18x18xf32>
    %104 = vector.shape_cast %103 : vector<1x1x18x18xf32> to vector<18x18xf32>
    %c17 = arith.constant 17 : index
    %105 = memref.load %arg2[%c17] : memref<27xf32, #tpu.memory_space<smem>>
    %106 = vector.broadcast %105 : f32 to vector<18x18xf32>
    %107 = arith.mulf %106, %104 : vector<18x18xf32>
    %108 = arith.addf %102, %107 : vector<18x18xf32>
    %c0_72 = arith.constant 0 : index
    %c2_73 = arith.constant 2 : index
    %c0_74 = arith.constant 0 : index
    %c0_75 = arith.constant 0 : index
    %109 = vector.load %arg1[%c0_72, %c2_73, %c0_74, %c0_75] : memref<1x3x20x20xf32, #tpu.memory_space<vmem>>, vector<1x1x18x18xf32>
    %110 = vector.shape_cast %109 : vector<1x1x18x18xf32> to vector<18x18xf32>
    %c18 = arith.constant 18 : index
    %111 = memref.load %arg2[%c18] : memref<27xf32, #tpu.memory_space<smem>>
    %112 = vector.broadcast %111 : f32 to vector<18x18xf32>
    %113 = arith.mulf %112, %110 : vector<18x18xf32>
    %114 = arith.addf %108, %113 : vector<18x18xf32>
    %c0_76 = arith.constant 0 : index
    %c2_77 = arith.constant 2 : index
    %c0_78 = arith.constant 0 : index
    %c1_79 = arith.constant 1 : index
    %115 = vector.load %arg1[%c0_76, %c2_77, %c0_78, %c1_79] : memref<1x3x20x20xf32, #tpu.memory_space<vmem>>, vector<1x1x18x18xf32>
    %116 = vector.shape_cast %115 : vector<1x1x18x18xf32> to vector<18x18xf32>
    %c19 = arith.constant 19 : index
    %117 = memref.load %arg2[%c19] : memref<27xf32, #tpu.memory_space<smem>>
    %118 = vector.broadcast %117 : f32 to vector<18x18xf32>
    %119 = arith.mulf %118, %116 : vector<18x18xf32>
    %120 = arith.addf %114, %119 : vector<18x18xf32>
    %c0_80 = arith.constant 0 : index
    %c2_81 = arith.constant 2 : index
    %c0_82 = arith.constant 0 : index
    %c2_83 = arith.constant 2 : index
    %121 = vector.load %arg1[%c0_80, %c2_81, %c0_82, %c2_83] : memref<1x3x20x20xf32, #tpu.memory_space<vmem>>, vector<1x1x18x18xf32>
    %122 = vector.shape_cast %121 : vector<1x1x18x18xf32> to vector<18x18xf32>
    %c20 = arith.constant 20 : index
    %123 = memref.load %arg2[%c20] : memref<27xf32, #tpu.memory_space<smem>>
    %124 = vector.broadcast %123 : f32 to vector<18x18xf32>
    %125 = arith.mulf %124, %122 : vector<18x18xf32>
    %126 = arith.addf %120, %125 : vector<18x18xf32>
    %c0_84 = arith.constant 0 : index
    %c2_85 = arith.constant 2 : index
    %c1_86 = arith.constant 1 : index
    %c0_87 = arith.constant 0 : index
    %127 = vector.load %arg1[%c0_84, %c2_85, %c1_86, %c0_87] : memref<1x3x20x20xf32, #tpu.memory_space<vmem>>, vector<1x1x18x18xf32>
    %128 = vector.shape_cast %127 : vector<1x1x18x18xf32> to vector<18x18xf32>
    %c21 = arith.constant 21 : index
    %129 = memref.load %arg2[%c21] : memref<27xf32, #tpu.memory_space<smem>>
    %130 = vector.broadcast %129 : f32 to vector<18x18xf32>
    %131 = arith.mulf %130, %128 : vector<18x18xf32>
    %132 = arith.addf %126, %131 : vector<18x18xf32>
    %c0_88 = arith.constant 0 : index
    %c2_89 = arith.constant 2 : index
    %c1_90 = arith.constant 1 : index
    %c1_91 = arith.constant 1 : index
    %133 = vector.load %arg1[%c0_88, %c2_89, %c1_90, %c1_91] : memref<1x3x20x20xf32, #tpu.memory_space<vmem>>, vector<1x1x18x18xf32>
    %134 = vector.shape_cast %133 : vector<1x1x18x18xf32> to vector<18x18xf32>
    %c22 = arith.constant 22 : index
    %135 = memref.load %arg2[%c22] : memref<27xf32, #tpu.memory_space<smem>>
    %136 = vector.broadcast %135 : f32 to vector<18x18xf32>
    %137 = arith.mulf %136, %134 : vector<18x18xf32>
    %138 = arith.addf %132, %137 : vector<18x18xf32>
    %c0_92 = arith.constant 0 : index
    %c2_93 = arith.constant 2 : index
    %c1_94 = arith.constant 1 : index
    %c2_95 = arith.constant 2 : index
    %139 = vector.load %arg1[%c0_92, %c2_93, %c1_94, %c2_95] : memref<1x3x20x20xf32, #tpu.memory_space<vmem>>, vector<1x1x18x18xf32>
    %140 = vector.shape_cast %139 : vector<1x1x18x18xf32> to vector<18x18xf32>
    %c23 = arith.constant 23 : index
    %141 = memref.load %arg2[%c23] : memref<27xf32, #tpu.memory_space<smem>>
    %142 = vector.broadcast %141 : f32 to vector<18x18xf32>
    %143 = arith.mulf %142, %140 : vector<18x18xf32>
    %144 = arith.addf %138, %143 : vector<18x18xf32>
    %c0_96 = arith.constant 0 : index
    %c2_97 = arith.constant 2 : index
    %c2_98 = arith.constant 2 : index
    %c0_99 = arith.constant 0 : index
    %145 = vector.load %arg1[%c0_96, %c2_97, %c2_98, %c0_99] : memref<1x3x20x20xf32, #tpu.memory_space<vmem>>, vector<1x1x18x18xf32>
    %146 = vector.shape_cast %145 : vector<1x1x18x18xf32> to vector<18x18xf32>
    %c24 = arith.constant 24 : index
    %147 = memref.load %arg2[%c24] : memref<27xf32, #tpu.memory_space<smem>>
    %148 = vector.broadcast %147 : f32 to vector<18x18xf32>
    %149 = arith.mulf %148, %146 : vector<18x18xf32>
    %150 = arith.addf %144, %149 : vector<18x18xf32>
    %c0_100 = arith.constant 0 : index
    %c2_101 = arith.constant 2 : index
    %c2_102 = arith.constant 2 : index
    %c1_103 = arith.constant 1 : index
    %151 = vector.load %arg1[%c0_100, %c2_101, %c2_102, %c1_103] : memref<1x3x20x20xf32, #tpu.memory_space<vmem>>, vector<1x1x18x18xf32>
    %152 = vector.shape_cast %151 : vector<1x1x18x18xf32> to vector<18x18xf32>
    %c25 = arith.constant 25 : index
    %153 = memref.load %arg2[%c25] : memref<27xf32, #tpu.memory_space<smem>>
    %154 = vector.broadcast %153 : f32 to vector<18x18xf32>
    %155 = arith.mulf %154, %152 : vector<18x18xf32>
    %156 = arith.addf %150, %155 : vector<18x18xf32>
    %c0_104 = arith.constant 0 : index
    %c2_105 = arith.constant 2 : index
    %c2_106 = arith.constant 2 : index
    %c2_107 = arith.constant 2 : index
    %157 = vector.load %arg1[%c0_104, %c2_105, %c2_106, %c2_107] : memref<1x3x20x20xf32, #tpu.memory_space<vmem>>, vector<1x1x18x18xf32>
    %158 = vector.shape_cast %157 : vector<1x1x18x18xf32> to vector<18x18xf32>
    %c26 = arith.constant 26 : index
    %159 = memref.load %arg2[%c26] : memref<27xf32, #tpu.memory_space<smem>>
    %160 = vector.broadcast %159 : f32 to vector<18x18xf32>
    %161 = arith.mulf %160, %158 : vector<18x18xf32>
    %162 = arith.addf %156, %161 : vector<18x18xf32>
    %c0_108 = arith.constant 0 : index
    %163 = memref.load %arg3[%c0_108] : memref<1xf32, #tpu.memory_space<smem>>
    %164 = vector.broadcast %163 : f32 to vector<18x18xf32>
    %165 = arith.addf %162, %164 : vector<18x18xf32>
    %cst_109 = arith.constant 0.000000e+00 : f32
    %166 = vector.broadcast %cst_109 : f32 to vector<18x18xf32>
    %167 = arith.cmpf oge, %165, %166 : vector<18x18xf32>
    %cst_110 = arith.constant 2.000000e-01 : f32
    %168 = vector.broadcast %cst_110 : f32 to vector<18x18xf32>
    %169 = arith.mulf %168, %165 : vector<18x18xf32>
    %170 = arith.select %167, %165, %169 : vector<18x18xi1>, vector<18x18xf32>
    %171 = tpu.iota {dimensions = array<i32: 0>} : vector<18x18xi32>
    %172 = tpu.iota {dimensions = array<i32: 1>} : vector<18x18xi32>
    %c1_i32 = arith.constant 1 : i32
    %173 = vector.broadcast %c1_i32 : i32 to vector<18x18xi32>
    %174 = arith.cmpi sge, %171, %173 : vector<18x18xi32>
    %c16_i32 = arith.constant 16 : i32
    %175 = vector.broadcast %c16_i32 : i32 to vector<18x18xi32>
    %176 = arith.cmpi sle, %171, %175 : vector<18x18xi32>
    %177 = arith.andi %174, %176 : vector<18x18xi1>
    %c1_i32_111 = arith.constant 1 : i32
    %178 = vector.broadcast %c1_i32_111 : i32 to vector<18x18xi32>
    %179 = arith.cmpi sge, %172, %178 : vector<18x18xi32>
    %180 = arith.andi %177, %179 : vector<18x18xi1>
    %c16_i32_112 = arith.constant 16 : i32
    %181 = vector.broadcast %c16_i32_112 : i32 to vector<18x18xi32>
    %182 = arith.cmpi sle, %172, %181 : vector<18x18xi32>
    %183 = arith.andi %180, %182 : vector<18x18xi1>
    %cst_113 = arith.constant 0.000000e+00 : f32
    %184 = vector.broadcast %cst_113 : f32 to vector<18x18xf32>
    %185 = arith.select %183, %170, %184 : vector<18x18xi1>, vector<18x18xf32>
    %c0_114 = arith.constant 0 : index
    %c0_115 = arith.constant 0 : index
    %186 = vector.load %arg7[%c0_114, %c0_115] : memref<18x18xf32, #tpu.memory_space<vmem>>, vector<18x18xf32>
    tpu.vector_store %arg7[%c0_114, %c0_115], %185 {strides = array<i32>} : memref<18x18xf32, #tpu.memory_space<vmem>>, vector<18x18xf32>,
    %c0_116 = arith.constant 0 : index
    %c0_117 = arith.constant 0 : index
    %187 = vector.load %arg7[%c0_116, %c0_117] : memref<18x18xf32, #tpu.memory_space<vmem>>, vector<16x16xf32>
    %c0_118 = arith.constant 0 : index
    %c1_119 = arith.constant 1 : index
    %188 = vector.load %arg7[%c0_118, %c1_119] : memref<18x18xf32, #tpu.memory_space<vmem>>, vector<16x16xf32>
    %c0_120 = arith.constant 0 : index
    %c2_121 = arith.constant 2 : index
    %189 = vector.load %arg7[%c0_120, %c2_121] : memref<18x18xf32, #tpu.memory_space<vmem>>, vector<16x16xf32>
    %c1_122 = arith.constant 1 : index
    %c0_123 = arith.constant 0 : index
    %190 = vector.load %arg7[%c1_122, %c0_123] : memref<18x18xf32, #tpu.memory_space<vmem>>, vector<16x16xf32>
    %c1_124 = arith.constant 1 : index
    %c1_125 = arith.constant 1 : index
    %191 = vector.load %arg7[%c1_124, %c1_125] : memref<18x18xf32, #tpu.memory_space<vmem>>, vector<16x16xf32>
    %c1_126 = arith.constant 1 : index
    %c2_127 = arith.constant 2 : index
    %192 = vector.load %arg7[%c1_126, %c2_127] : memref<18x18xf32, #tpu.memory_space<vmem>>, vector<16x16xf32>
    %c2_128 = arith.constant 2 : index
    %c0_129 = arith.constant 0 : index
    %193 = vector.load %arg7[%c2_128, %c0_129] : memref<18x18xf32, #tpu.memory_space<vmem>>, vector<16x16xf32>
    %c2_130 = arith.constant 2 : index
    %c1_131 = arith.constant 1 : index
    %194 = vector.load %arg7[%c2_130, %c1_131] : memref<18x18xf32, #tpu.memory_space<vmem>>, vector<16x16xf32>
    %c2_132 = arith.constant 2 : index
    %c2_133 = arith.constant 2 : index
    %195 = vector.load %arg7[%c2_132, %c2_133] : memref<18x18xf32, #tpu.memory_space<vmem>>, vector<16x16xf32>
    %cst_134 = arith.constant 0.000000e+00 : f32
    %196 = vector.broadcast %cst_134 : f32 to vector<16x16xf32>
    %c0_135 = arith.constant 0 : index
    %197 = memref.load %arg4[%c0_135] : memref<27xf32, #tpu.memory_space<smem>>
    %198 = vector.broadcast %197 : f32 to vector<16x16xf32>
    %199 = arith.mulf %198, %187 : vector<16x16xf32>
    %200 = arith.addf %196, %199 : vector<16x16xf32>
    %c1_136 = arith.constant 1 : index
    %201 = memref.load %arg4[%c1_136] : memref<27xf32, #tpu.memory_space<smem>>
    %202 = vector.broadcast %201 : f32 to vector<16x16xf32>
    %203 = arith.mulf %202, %188 : vector<16x16xf32>
    %204 = arith.addf %200, %203 : vector<16x16xf32>
    %c2_137 = arith.constant 2 : index
    %205 = memref.load %arg4[%c2_137] : memref<27xf32, #tpu.memory_space<smem>>
    %206 = vector.broadcast %205 : f32 to vector<16x16xf32>
    %207 = arith.mulf %206, %189 : vector<16x16xf32>
    %208 = arith.addf %204, %207 : vector<16x16xf32>
    %c3_138 = arith.constant 3 : index
    %209 = memref.load %arg4[%c3_138] : memref<27xf32, #tpu.memory_space<smem>>
    %210 = vector.broadcast %209 : f32 to vector<16x16xf32>
    %211 = arith.mulf %210, %190 : vector<16x16xf32>
    %212 = arith.addf %208, %211 : vector<16x16xf32>
    %c4_139 = arith.constant 4 : index
    %213 = memref.load %arg4[%c4_139] : memref<27xf32, #tpu.memory_space<smem>>
    %214 = vector.broadcast %213 : f32 to vector<16x16xf32>
    %215 = arith.mulf %214, %191 : vector<16x16xf32>
    %216 = arith.addf %212, %215 : vector<16x16xf32>
    %c5_140 = arith.constant 5 : index
    %217 = memref.load %arg4[%c5_140] : memref<27xf32, #tpu.memory_space<smem>>
    %218 = vector.broadcast %217 : f32 to vector<16x16xf32>
    %219 = arith.mulf %218, %192 : vector<16x16xf32>
    %220 = arith.addf %216, %219 : vector<16x16xf32>
    %c6_141 = arith.constant 6 : index
    %221 = memref.load %arg4[%c6_141] : memref<27xf32, #tpu.memory_space<smem>>
    %222 = vector.broadcast %221 : f32 to vector<16x16xf32>
    %223 = arith.mulf %222, %193 : vector<16x16xf32>
    %224 = arith.addf %220, %223 : vector<16x16xf32>
    %c7_142 = arith.constant 7 : index
    %225 = memref.load %arg4[%c7_142] : memref<27xf32, #tpu.memory_space<smem>>
    %226 = vector.broadcast %225 : f32 to vector<16x16xf32>
    %227 = arith.mulf %226, %194 : vector<16x16xf32>
    %228 = arith.addf %224, %227 : vector<16x16xf32>
    %c8_143 = arith.constant 8 : index
    %229 = memref.load %arg4[%c8_143] : memref<27xf32, #tpu.memory_space<smem>>
    %230 = vector.broadcast %229 : f32 to vector<16x16xf32>
    %231 = arith.mulf %230, %195 : vector<16x16xf32>
    %232 = arith.addf %228, %231 : vector<16x16xf32>
    %c0_144 = arith.constant 0 : index
    %233 = memref.load %arg5[%c0_144] : memref<3xf32, #tpu.memory_space<smem>>
    %234 = vector.broadcast %233 : f32 to vector<16x16xf32>
    %235 = arith.addf %232, %234 : vector<16x16xf32>
    %c0_145 = arith.constant 0 : index
    %c0_146 = arith.constant 0 : index
    %c0_147 = arith.constant 0 : index
    %c0_148 = arith.constant 0 : index
    %236 = vector.load %arg6[%c0_145, %c0_146, %c0_147, %c0_148] : memref<1x3x16x16xf32, #tpu.memory_space<vmem>>, vector<1x1x16x16xf32>
    %237 = vector.shape_cast %236 : vector<1x1x16x16xf32> to vector<16x16xf32>
    %238 = vector.shape_cast %235 : vector<16x16xf32> to vector<1x1x16x16xf32>
    tpu.vector_store %arg6[%c0_145, %c0_146, %c0_147, %c0_148], %238 {strides = array<i32>} : memref<1x3x16x16xf32, #tpu.memory_space<vmem>>, vector<1x1x16x16xf32>,
    %cst_149 = arith.constant 0.000000e+00 : f32
    %239 = vector.broadcast %cst_149 : f32 to vector<16x16xf32>
    %c9_150 = arith.constant 9 : index
    %240 = memref.load %arg4[%c9_150] : memref<27xf32, #tpu.memory_space<smem>>
    %241 = vector.broadcast %240 : f32 to vector<16x16xf32>
    %242 = arith.mulf %241, %187 : vector<16x16xf32>
    %243 = arith.addf %239, %242 : vector<16x16xf32>
    %c10_151 = arith.constant 10 : index
    %244 = memref.load %arg4[%c10_151] : memref<27xf32, #tpu.memory_space<smem>>
    %245 = vector.broadcast %244 : f32 to vector<16x16xf32>
    %246 = arith.mulf %245, %188 : vector<16x16xf32>
    %247 = arith.addf %243, %246 : vector<16x16xf32>
    %c11_152 = arith.constant 11 : index
    %248 = memref.load %arg4[%c11_152] : memref<27xf32, #tpu.memory_space<smem>>
    %249 = vector.broadcast %248 : f32 to vector<16x16xf32>
    %250 = arith.mulf %249, %189 : vector<16x16xf32>
    %251 = arith.addf %247, %250 : vector<16x16xf32>
    %c12_153 = arith.constant 12 : index
    %252 = memref.load %arg4[%c12_153] : memref<27xf32, #tpu.memory_space<smem>>
    %253 = vector.broadcast %252 : f32 to vector<16x16xf32>
    %254 = arith.mulf %253, %190 : vector<16x16xf32>
    %255 = arith.addf %251, %254 : vector<16x16xf32>
    %c13_154 = arith.constant 13 : index
    %256 = memref.load %arg4[%c13_154] : memref<27xf32, #tpu.memory_space<smem>>
    %257 = vector.broadcast %256 : f32 to vector<16x16xf32>
    %258 = arith.mulf %257, %191 : vector<16x16xf32>
    %259 = arith.addf %255, %258 : vector<16x16xf32>
    %c14_155 = arith.constant 14 : index
    %260 = memref.load %arg4[%c14_155] : memref<27xf32, #tpu.memory_space<smem>>
    %261 = vector.broadcast %260 : f32 to vector<16x16xf32>
    %262 = arith.mulf %261, %192 : vector<16x16xf32>
    %263 = arith.addf %259, %262 : vector<16x16xf32>
    %c15_156 = arith.constant 15 : index
    %264 = memref.load %arg4[%c15_156] : memref<27xf32, #tpu.memory_space<smem>>
    %265 = vector.broadcast %264 : f32 to vector<16x16xf32>
    %266 = arith.mulf %265, %193 : vector<16x16xf32>
    %267 = arith.addf %263, %266 : vector<16x16xf32>
    %c16_157 = arith.constant 16 : index
    %268 = memref.load %arg4[%c16_157] : memref<27xf32, #tpu.memory_space<smem>>
    %269 = vector.broadcast %268 : f32 to vector<16x16xf32>
    %270 = arith.mulf %269, %194 : vector<16x16xf32>
    %271 = arith.addf %267, %270 : vector<16x16xf32>
    %c17_158 = arith.constant 17 : index
    %272 = memref.load %arg4[%c17_158] : memref<27xf32, #tpu.memory_space<smem>>
    %273 = vector.broadcast %272 : f32 to vector<16x16xf32>
    %274 = arith.mulf %273, %195 : vector<16x16xf32>
    %275 = arith.addf %271, %274 : vector<16x16xf32>
    %c1_159 = arith.constant 1 : index
    %276 = memref.load %arg5[%c1_159] : memref<3xf32, #tpu.memory_space<smem>>
    %277 = vector.broadcast %276 : f32 to vector<16x16xf32>
    %278 = arith.addf %275, %277 : vector<16x16xf32>
    %c0_160 = arith.constant 0 : index
    %c1_161 = arith.constant 1 : index
    %c0_162 = arith.constant 0 : index
    %c0_163 = arith.constant 0 : index
    %279 = vector.load %arg6[%c0_160, %c1_161, %c0_162, %c0_163] : memref<1x3x16x16xf32, #tpu.memory_space<vmem>>, vector<1x1x16x16xf32>
    %280 = vector.shape_cast %279 : vector<1x1x16x16xf32> to vector<16x16xf32>
    %281 = vector.shape_cast %278 : vector<16x16xf32> to vector<1x1x16x16xf32>
    tpu.vector_store %arg6[%c0_160, %c1_161, %c0_162, %c0_163], %281 {strides = array<i32>} : memref<1x3x16x16xf32, #tpu.memory_space<vmem>>, vector<1x1x16x16xf32>,
    %cst_164 = arith.constant 0.000000e+00 : f32
    %282 = vector.broadcast %cst_164 : f32 to vector<16x16xf32>
    %c18_165 = arith.constant 18 : index
    %283 = memref.load %arg4[%c18_165] : memref<27xf32, #tpu.memory_space<smem>>
    %284 = vector.broadcast %283 : f32 to vector<16x16xf32>
    %285 = arith.mulf %284, %187 : vector<16x16xf32>
    %286 = arith.addf %282, %285 : vector<16x16xf32>
    %c19_166 = arith.constant 19 : index
    %287 = memref.load %arg4[%c19_166] : memref<27xf32, #tpu.memory_space<smem>>
    %288 = vector.broadcast %287 : f32 to vector<16x16xf32>
    %289 = arith.mulf %288, %188 : vector<16x16xf32>
    %290 = arith.addf %286, %289 : vector<16x16xf32>
    %c20_167 = arith.constant 20 : index
    %291 = memref.load %arg4[%c20_167] : memref<27xf32, #tpu.memory_space<smem>>
    %292 = vector.broadcast %291 : f32 to vector<16x16xf32>
    %293 = arith.mulf %292, %189 : vector<16x16xf32>
    %294 = arith.addf %290, %293 : vector<16x16xf32>
    %c21_168 = arith.constant 21 : index
    %295 = memref.load %arg4[%c21_168] : memref<27xf32, #tpu.memory_space<smem>>
    %296 = vector.broadcast %295 : f32 to vector<16x16xf32>
    %297 = arith.mulf %296, %190 : vector<16x16xf32>
    %298 = arith.addf %294, %297 : vector<16x16xf32>
    %c22_169 = arith.constant 22 : index
    %299 = memref.load %arg4[%c22_169] : memref<27xf32, #tpu.memory_space<smem>>
    %300 = vector.broadcast %299 : f32 to vector<16x16xf32>
    %301 = arith.mulf %300, %191 : vector<16x16xf32>
    %302 = arith.addf %298, %301 : vector<16x16xf32>
    %c23_170 = arith.constant 23 : index
    %303 = memref.load %arg4[%c23_170] : memref<27xf32, #tpu.memory_space<smem>>
    %304 = vector.broadcast %303 : f32 to vector<16x16xf32>
    %305 = arith.mulf %304, %192 : vector<16x16xf32>
    %306 = arith.addf %302, %305 : vector<16x16xf32>
    %c24_171 = arith.constant 24 : index
    %307 = memref.load %arg4[%c24_171] : memref<27xf32, #tpu.memory_space<smem>>
    %308 = vector.broadcast %307 : f32 to vector<16x16xf32>
    %309 = arith.mulf %308, %193 : vector<16x16xf32>
    %310 = arith.addf %306, %309 : vector<16x16xf32>
    %c25_172 = arith.constant 25 : index
    %311 = memref.load %arg4[%c25_172] : memref<27xf32, #tpu.memory_space<smem>>
    %312 = vector.broadcast %311 : f32 to vector<16x16xf32>
    %313 = arith.mulf %312, %194 : vector<16x16xf32>
    %314 = arith.addf %310, %313 : vector<16x16xf32>
    %c26_173 = arith.constant 26 : index
    %315 = memref.load %arg4[%c26_173] : memref<27xf32, #tpu.memory_space<smem>>
    %316 = vector.broadcast %315 : f32 to vector<16x16xf32>
    %317 = arith.mulf %316, %195 : vector<16x16xf32>
    %318 = arith.addf %314, %317 : vector<16x16xf32>
    %c2_174 = arith.constant 2 : index
    %319 = memref.load %arg5[%c2_174] : memref<3xf32, #tpu.memory_space<smem>>
    %320 = vector.broadcast %319 : f32 to vector<16x16xf32>
    %321 = arith.addf %318, %320 : vector<16x16xf32>
    %c0_175 = arith.constant 0 : index
    %c2_176 = arith.constant 2 : index
    %c0_177 = arith.constant 0 : index
    %c0_178 = arith.constant 0 : index
    %322 = vector.load %arg6[%c0_175, %c2_176, %c0_177, %c0_178] : memref<1x3x16x16xf32, #tpu.memory_space<vmem>>, vector<1x1x16x16xf32>
    %323 = vector.shape_cast %322 : vector<1x1x16x16xf32> to vector<16x16xf32>
    %324 = vector.shape_cast %321 : vector<16x16xf32> to vector<1x1x16x16xf32>
    tpu.vector_store %arg6[%c0_175, %c2_176, %c0_177, %c0_178], %324 {strides = array<i32>} : memref<1x3x16x16xf32, #tpu.memory_space<vmem>>, vector<1x1x16x16xf32>,
    return
  }
  func.func @transform_0(%arg0: i32) -> (i32, i32, i32, i32) {
    %c0_i32 = arith.constant 0 : i32
    %c0_i32_0 = arith.constant 0 : i32
    %c0_i32_1 = arith.constant 0 : i32
    %c0_i32_2 = arith.constant 0 : i32
    return %arg0, %c0_i32, %c0_i32_0, %c0_i32_1 : i32, i32, i32, i32
  }
  func.func @transform_1(%arg0: i32) -> i32 {
    %c0_i32 = arith.constant 0 : i32
    %c0_i32_0 = arith.constant 0 : i32
    return %c0_i32 : i32
  }
  func.func @transform_2(%arg0: i32) -> i32 {
    %c0_i32 = arith.constant 0 : i32
    %c0_i32_0 = arith.constant 0 : i32
    return %c0_i32 : i32
  }
  func.func @transform_3(%arg0: i32) -> i32 {
    %c0_i32 = arith.constant 0 : i32
    %c0_i32_0 = arith.constant 0 : i32
    return %c0_i32 : i32
  }
  func.func @transform_4(%arg0: i32) -> i32 {
    %c0_i32 = arith.constant 0 : i32
    %c0_i32_0 = arith.constant 0 : i32
    return %c0_i32 : i32
  }
  func.func @transform_5(%arg0: i32) -> (i32, i32, i32, i32) {
    %c0_i32 = arith.constant 0 : i32
    %c0_i32_0 = arith.constant 0 : i32
    %c0_i32_1 = arith.constant 0 : i32
    %c0_i32_2 = arith.constant 0 : i32
    return %arg0, %c0_i32, %c0_i32_0, %c0_i32_1 : i32, i32, i32, i32
  }
}

</mosaic_0001>

<llo_original>
// kernel: img_g_forward.1
$region0: #{img_g_forward.1}
  #allocation0 [shape = 'u32[]', space=smem, size = 0x4, offset = 0x4, fixed_abs, tag = 'smem constant byte address 0x4 - core index']
  #allocation1 [shape = 'u32[144,128]{1,0:T(1,128)}', space=vmem, size = 0x12000, scoped, tag = 'internal scratch']
  #allocation2 [shape = 'f32[18,18]{1,0:T(8,128)}', space=vmem, size = 0x3000, scoped, tag = 'scratch operand']
  #allocation3 [shape = 'f32[1]{0:T(128)S(6)}', space=smem, size = 0x200, scoped, tag = 'scoped memory for img_g_forward.1']
  %s0 = inlined_call_operand.vmem [shape: f32[2,3,20,20], index: 0, kind: input, shape index: {}]
  %s1 = inlined_call_operand.vmem [shape: f32[27], index: 1, kind: input, shape index: {}]
  %s2 = inlined_call_operand.<no memory space> [shape: f32[1], index: 2, kind: input, shape index: {}]
  %s3 = inlined_call_operand.vmem [shape: f32[27], index: 3, kind: input, shape index: {}]
  %s4 = inlined_call_operand.vmem [shape: f32[3], index: 4, kind: input, shape index: {}]
  %s5 = inlined_call_operand.hbm [shape: f32[2,3,16,16], index: 5, kind: output, shape index: {}]
  %s6 = sld [smem:[#allocation0]]
  $region65: #{img_g_forward.1} parent=0
    _
  %s8 = ssub.s32 1, %s6
  %s9 = scalar_select 0, %s8, %s6
  %10 = sst [smem:[#allocation3]] %s2
  $region1: #{img_g_forward.1} parent=0
    #allocation4 [shape = 'u8[512]{0}', space=smem, size = 0x200, scoped, tag = 'input window, operand 1, single buffered']
    #allocation5 [shape = 's32[2]{0}', space=sflag, size = 0x8, scoped, tag = 'scoped memory for img_g_forward.1']
    #allocation6 [shape = 's32[2]{0}', space=sflag, size = 0x8, scoped, tag = 'scoped memory for img_g_forward.1']
    #allocation7 [shape = 'u8[512]{0}', space=smem, size = 0x200, scoped, tag = 'input window, operand 3, single buffered']
    #allocation8 [shape = 's32[1]{0}', space=sflag, size = 0x4, scoped, tag = 'scoped memory for img_g_forward.1']
    #allocation9 [shape = 'u8[512]{0}', space=smem, size = 0x200, scoped, tag = 'input window, operand 4, single buffered']
    #allocation10 [shape = 'u8[49152]{0}', space=vmem, size = 0xc000, scoped, tag = 'output window, operand 0']
    %11 = vsyncpa [#allocation6], 0
    %12 = vsyncpa [#allocation8], 0
    %13 = vsyncpa [#allocation5], 0
    %s14 = scalar_lea.sflag [#allocation5], 1
    %15 = vsyncpa %s14, 0
    loop: start=0, step=1, limit=4
    $region2: #{img_g_forward.1} parent=1 // loop_pre_header
      _
    $region3: #{img_g_forward.1} parent=1 // loop_header
      %s17 = sphi 0, %s21
      %p18 = scmp.ge.s32.totalorder %s17, 4
      %s27 = sphi 0, %s29
      %s30 = sphi 0, %s27
      %s31 = sphi 0, %s30
      %s47 = sphi 0, %s31
      %s51 = sphi 0, %s51
      %s53 = sphi 0, %s51
      %s54 = sphi 0, %s53
      %s68 = sphi 0, %s54
      %s72 = sphi 0, %s72
      %s74 = sphi 0, %s72
      %s75 = sphi 0, %s74
      %s89 = sphi 0, %s75
      %s93 = sphi 0, %s93
      %s95 = sphi 0, %s93
      %s96 = sphi 0, %s95
      %s110 = sphi 0, %s96
      %s114 = sphi 0, %s114
      %s116 = sphi 0, %s114
      %s117 = sphi 0, %s116
      %s131 = sphi 0, %s117
      %s137 = sphi 0, %s139
      %s140 = sphi 0, %s137
      %s141 = sphi 0, %s140
      %s157 = sphi 0, %s141
    $region4: #{img_g_forward.1} parent=1 // loop_header_branch
      %20 = sbr.rel (%p18) target = $region8
    $region5: #{img_g_forward.1} parent=1 // loop_body
      %s22 = ssub.s32 %s17, 1
      %s23 = ssub.s32 %s17, 2
      %s24 = sadd.s32 %s17, 1
      %s25 = ssub.s32 %s17, %s24
      %p26 = scmp.eq.s32.totalorder %s25, 0
      %s28 = sadd.s32 %s27, 1
      %s29 = scalar_select %p26, %s27, %s28
      %p32 = pneg %p26
      %p33 = scmp.eq.s32.totalorder %s17, 1
      %p34 = por %p32, %p33
      %p35 = scmp.ne.s32.totalorder %s27, %s30
      %p36 = scmp.eq.s32.totalorder %s17, 0
      %p37 = por %p35, %p36
      %p38 = scmp.ne.s32.totalorder %s27, %s30
      %p39 = scmp.eq.s32.totalorder %s22, 1
      %p40 = por %p38, %p39
      %p41 = scmp.ne.s32.totalorder %s30, %s31
      %p42 = scmp.eq.s32.totalorder %s22, 0
      %p43 = por %p41, %p42
      %p44 = scmp.ne.s32.totalorder %s30, %s31
      %p45 = scmp.eq.s32.totalorder %s23, 1
      %p46 = por %p44, %p45
      %p48 = scmp.ne.s32.totalorder %s31, %s47
      %p49 = scmp.eq.s32.totalorder %s23, 0
      %p50 = por %p48, %p49
      %s52 = sadd.s32 %s51, 1
      %p55 = scmp.eq.s32.totalorder %s17, 1
      %p56 = scmp.ne.s32.totalorder %s51, %s53
      %p57 = scmp.eq.s32.totalorder %s17, 0
      %p58 = por %p56, %p57
      %p59 = scmp.ne.s32.totalorder %s51, %s53
      %p60 = scmp.eq.s32.totalorder %s22, 1
      %p61 = por %p59, %p60
      %p62 = scmp.ne.s32.totalorder %s53, %s54
      %p63 = scmp.eq.s32.totalorder %s22, 0
      %p64 = por %p62, %p63
      %p65 = scmp.ne.s32.totalorder %s53, %s54
      %p66 = scmp.eq.s32.totalorder %s23, 1
      %p67 = por %p65, %p66
      %p69 = scmp.ne.s32.totalorder %s54, %s68
      %p70 = scmp.eq.s32.totalorder %s23, 0
      %p71 = por %p69, %p70
      %s73 = sadd.s32 %s72, 1
      %p76 = scmp.eq.s32.totalorder %s17, 1
      %p77 = scmp.ne.s32.totalorder %s72, %s74
      %p78 = scmp.eq.s32.totalorder %s17, 0
      %p79 = por %p77, %p78
      %p80 = scmp.ne.s32.totalorder %s72, %s74
      %p81 = scmp.eq.s32.totalorder %s22, 1
      %p82 = por %p80, %p81
      %p83 = scmp.ne.s32.totalorder %s74, %s75
      %p84 = scmp.eq.s32.totalorder %s22, 0
      %p85 = por %p83, %p84
      %p86 = scmp.ne.s32.totalorder %s74, %s75
      %p87 = scmp.eq.s32.totalorder %s23, 1
      %p88 = por %p86, %p87
      %p90 = scmp.ne.s32.totalorder %s75, %s89
      %p91 = scmp.eq.s32.totalorder %s23, 0
      %p92 = por %p90, %p91
      %s94 = sadd.s32 %s93, 1
      %p97 = scmp.eq.s32.totalorder %s17, 1
      %p98 = scmp.ne.s32.totalorder %s93, %s95
      %p99 = scmp.eq.s32.totalorder %s17, 0
      %p100 = por %p98, %p99
      %p101 = scmp.ne.s32.totalorder %s93, %s95
      %p102 = scmp.eq.s32.totalorder %s22, 1
      %p103 = por %p101, %p102
      %p104 = scmp.ne.s32.totalorder %s95, %s96
      %p105 = scmp.eq.s32.totalorder %s22, 0
      %p106 = por %p104, %p105
      %p107 = scmp.ne.s32.totalorder %s95, %s96
      %p108 = scmp.eq.s32.totalorder %s23, 1
      %p109 = por %p107, %p108
      %p111 = scmp.ne.s32.totalorder %s96, %s110
      %p112 = scmp.eq.s32.totalorder %s23, 0
      %p113 = por %p111, %p112
      %s115 = sadd.s32 %s114, 1
      %p118 = scmp.eq.s32.totalorder %s17, 1
      %p119 = scmp.ne.s32.totalorder %s114, %s116
      %p120 = scmp.eq.s32.totalorder %s17, 0
      %p121 = por %p119, %p120
      %p122 = scmp.ne.s32.totalorder %s114, %s116
      %p123 = scmp.eq.s32.totalorder %s22, 1
      %p124 = por %p122, %p123
      %p125 = scmp.ne.s32.totalorder %s116, %s117
      %p126 = scmp.eq.s32.totalorder %s22, 0
      %p127 = por %p125, %p126
      %p128 = scmp.ne.s32.totalorder %s116, %s117
      %p129 = scmp.eq.s32.totalorder %s23, 1
      %p130 = por %p128, %p129
      %p132 = scmp.ne.s32.totalorder %s117, %s131
      %p133 = scmp.eq.s32.totalorder %s23, 0
      %p134 = por %p132, %p133
      %s135 = ssub.s32 %s17, %s24
      %p136 = scmp.eq.s32.totalorder %s135, 0
      %s138 = sadd.s32 %s137, 1
      %s139 = scalar_select %p136, %s137, %s138
      %p142 = pneg %p136
      %p143 = scmp.eq.s32.totalorder %s17, 1
      %p144 = por %p142, %p143
      %p145 = scmp.ne.s32.totalorder %s137, %s140
      %p146 = scmp.eq.s32.totalorder %s17, 0
      %p147 = por %p145, %p146
      %p148 = scmp.ne.s32.totalorder %s137, %s140
      %p149 = scmp.eq.s32.totalorder %s22, 1
      %p150 = por %p148, %p149
      %p151 = scmp.ne.s32.totalorder %s140, %s141
      %p152 = scmp.eq.s32.totalorder %s22, 0
      %p153 = por %p151, %p152
      %p154 = scmp.ne.s32.totalorder %s140, %s141
      %p155 = scmp.eq.s32.totalorder %s23, 1
      %p156 = por %p154, %p155
      %p158 = scmp.ne.s32.totalorder %s141, %s157
      %p159 = scmp.eq.s32.totalorder %s23, 0
      %p160 = por %p158, %p159
      %p161 = scmp.le.s32.totalorder 1, %s17
      %p162 = scmp.lt.s32.totalorder %s17, 3
      %p163 = pnand %p161, %p162
      %p164 = pneg %p163
      // Predicated region
      $region9: #{img_g_forward.1} parent=5 // pred_check
        _
      $region10: #{img_g_forward.1} parent=5 // pred_check_branch
        %166 = sbr.rel (%p163) target = $region12
      $region11: #{img_g_forward.1} parent=5 // pred_region
        %s167 = ssub.s32 %s17, 1
        // Predicated region
        $region13: #{img_g_forward.1} parent=11 // pred_check
          %p168 = pneg %p64
        $region14: #{img_g_forward.1} parent=11 // pred_check_branch
          %170 = sbr.rel (%p168) target = $region16
        $region15: #{img_g_forward.1} parent=11 // pred_region
          %s172 = ssub.s32 16, 16
          %173 = vsyncadd [#allocation6], %s172
          %s175 = sshll.u32 %s1, 4
          %s176 = int_to_ptr.vmem [resolvable:$true] %s175
          %178 = dma.vmem_to_smem %s176, 16, [#allocation4], [#allocation6]
        $region16: #{img_g_forward.1} parent=11 // pred_fallthru
          _
        // Predicated region
        $region17: #{img_g_forward.1} parent=11 // pred_check
          %p179 = pneg %p85
        $region18: #{img_g_forward.1} parent=11 // pred_check_branch
          %181 = sbr.rel (%p179) target = $region20
        $region19: #{img_g_forward.1} parent=11 // pred_region
          _
        $region20: #{img_g_forward.1} parent=11 // pred_fallthru
          _
        // Predicated region
        $region21: #{img_g_forward.1} parent=11 // pred_check
          %p182 = pneg %p106
        $region22: #{img_g_forward.1} parent=11 // pred_check_branch
          %184 = sbr.rel (%p182) target = $region24
        $region23: #{img_g_forward.1} parent=11 // pred_region
          %s186 = ssub.s32 16, 16
          %187 = vsyncadd [#allocation8], %s186
          %s189 = sshll.u32 %s3, 4
          %s190 = int_to_ptr.vmem [resolvable:$true] %s189
          %192 = dma.vmem_to_smem %s190, 16, [#allocation7], [#allocation8]
        $region24: #{img_g_forward.1} parent=11 // pred_fallthru
          _
        // Predicated region
        $region25: #{img_g_forward.1} parent=11 // pred_check
          %p193 = pneg %p127
        $region26: #{img_g_forward.1} parent=11 // pred_check_branch
          %195 = sbr.rel (%p193) target = $region28
        $region27: #{img_g_forward.1} parent=11 // pred_region
          %s197 = ssub.s32 16, 16
          %198 = vsyncadd [#allocation8], %s197
          %s200 = sshll.u32 %s4, 4
          %s201 = int_to_ptr.vmem [resolvable:$true] %s200
          %203 = dma.vmem_to_smem %s201, 16, [#allocation9], [#allocation8]
        $region28: #{img_g_forward.1} parent=11 // pred_fallthru
          _
      $region12: #{img_g_forward.1} parent=5 // pred_fallthru
        _
      %p204 = scmp.lt.s32.totalorder %s17, 2
      // Predicated region
      $region29: #{img_g_forward.1} parent=5 // pred_check
        %p205 = pneg %p204
      $region30: #{img_g_forward.1} parent=5 // pred_check_branch
        %207 = sbr.rel (%p205) target = $region32
      $region31: #{img_g_forward.1} parent=5 // pred_region
        // Predicated region
        $region33: #{img_g_forward.1} parent=31 // pred_check
          %p208 = pneg %p37
        $region34: #{img_g_forward.1} parent=31 // pred_check_branch
          %210 = sbr.rel (%p208) target = $region36
        $region35: #{img_g_forward.1} parent=31 // pred_region
          %p211 = scmp.lt.s32.totalorder %s17, 1
          %s212 = scalar_select %p211, %s17, 1
          %s213 = smul.addr %s212, 9
          %s214 = smul.addr %s213, 8
          %s215 = scalar_lea.vmem %s0, %s214
        $region36: #{img_g_forward.1} parent=31 // pred_fallthru
          _
      $region32: #{img_g_forward.1} parent=5 // pred_fallthru
        _
      %p216 = scmp.le.s32.totalorder 1, %s17
      %p217 = scmp.lt.s32.totalorder %s17, 3
      %p218 = pnand %p216, %p217
      %p219 = pneg %p218
      // Predicated region
      $region37: #{img_g_forward.1} parent=5 // pred_check
        _
      $region38: #{img_g_forward.1} parent=5 // pred_check_branch
        %221 = sbr.rel (%p218) target = $region40
      $region39: #{img_g_forward.1} parent=5 // pred_region
        %s222 = ssub.s32 %s17, 1
        // Predicated region
        $region41: #{img_g_forward.1} parent=39 // pred_check
          %p223 = pneg %p64
        $region42: #{img_g_forward.1} parent=39 // pred_check_branch
          %225 = sbr.rel (%p223) target = $region44
        $region43: #{img_g_forward.1} parent=39 // pred_region
          %226 = dma.done [#allocation6], 16
        $region44: #{img_g_forward.1} parent=39 // pred_fallthru
          _
        // Predicated region
        $region45: #{img_g_forward.1} parent=39 // pred_check
          %p227 = pneg %p106
        $region46: #{img_g_forward.1} parent=39 // pred_check_branch
          %229 = sbr.rel (%p227) target = $region48
        $region47: #{img_g_forward.1} parent=39 // pred_region
          %230 = dma.done [#allocation8], 16
        $region48: #{img_g_forward.1} parent=39 // pred_fallthru
          _
        // Predicated region
        $region49: #{img_g_forward.1} parent=39 // pred_check
          %p231 = pneg %p127
        $region50: #{img_g_forward.1} parent=39 // pred_check_branch
          %233 = sbr.rel (%p231) target = $region52
        $region51: #{img_g_forward.1} parent=39 // pred_region
          %234 = dma.done [#allocation8], 16
        $region52: #{img_g_forward.1} parent=39 // pred_fallthru
          _
        %235 = sfence
        %p236 = scmp.lt.s32.totalorder %s22, 1
        %s237 = scalar_select %p236, %s22, 1
        %s238 = smul.addr %s237, 9
        %s239 = smul.addr %s238, 8
        %s240 = scalar_lea.vmem %s0, %s239
        %p241 = pneg %p43
        %p242 = pneg %p40
        %p243 = pneg %p64
        %p244 = pneg %p61
        %p245 = pneg %p85
        %p246 = pneg %p82
        %p247 = pneg %p106
        %p248 = pneg %p103
        %p249 = pneg %p127
        %p250 = pneg %p124
        %p251 = pneg %p153
        %p252 = pneg %p150
        %s253 = sand.u32 %s140, 1
        %s254 = scalar_lea.sflag [#allocation5], %s253
        %s255 = sand.u32 %s140, 1
        %s256 = smul.addr %s255, 48
        %s257 = scalar_lea.vmem [#allocation10], %s256
        %p258 = scmp.lt.s32.totalorder %s22, 1
        %s259 = scalar_select %p258, %s22, 1
        %s260 = smul.addr %s259, 9
        %s261 = smul.addr %s260, 8
        %s262 = scalar_lea.vmem %s0, %s261
        %v263 = vld [vmem:[%s262] sm:$0xff]
        %v264 = vld [vmem:[%s262 + $0x8] sm:$0xff]
        %v265 = vld [vmem:[%s262 + $0x10] sm:$0x3]
        %s266 = sld [smem:[#allocation4]]
        %v267 = vstv %s266
        %v268 = vmul.f32 %v267, %v263
        %v269 = vmul.f32 %v267, %v264
        %v270 = vmul.f32 %v267, %v265
        %v271 = vadd.f32 %v268, 0.0
        %v272 = vadd.f32 %v269, 0.0
        %v273 = vadd.f32 %v270, 0.0
        %s274 = sld [smem:[#allocation4 + $0x1]]
        %v275 = vstv %s274
        %v276 = vmul.f32 %v275, %v263
        %v277 = vmul.f32 %v275, %v264
        %v278 = vmul.f32 %v275, %v265
        %282 = vrot.lane.b32.xlu0 %v276, 127
        %v283 = vpop.permute.xlu0 %282
        %284 = vrot.lane.b32.xlu0 %v277, 127
        %v285 = vpop.permute.xlu0 %284
        %286 = vrot.lane.b32.xlu0 %v278, 127
        %v287 = vpop.permute.xlu0 %286
        %v291 = vadd.f32 %v271, %v283
        %v292 = vadd.f32 %v272, %v285
        %v293 = vadd.f32 %v273, %v287
        %s294 = sld [smem:[#allocation4 + $0x2]]
        %v295 = vstv %s294
        %v296 = vmul.f32 %v295, %v263
        %v297 = vmul.f32 %v295, %v264
        %v298 = vmul.f32 %v295, %v265
        %302 = vrot.lane.b32.xlu0 %v296, 126
        %v303 = vpop.permute.xlu0 %302
        %304 = vrot.lane.b32.xlu0 %v297, 126
        %v305 = vpop.permute.xlu0 %304
        %306 = vrot.lane.b32.xlu0 %v298, 126
        %v307 = vpop.permute.xlu0 %306
        %v311 = vadd.f32 %v291, %v303
        %v312 = vadd.f32 %v292, %v305
        %v313 = vadd.f32 %v293, %v307
        %v314 = vld [vmem:[%s262 + $0x1] sm:$0xff]
        %v315 = vld [vmem:[%s262 + $0x9] sm:$0xff]
        %v316 = vld [vmem:[%s262 + $0x11] sm:$0x3]
        %s317 = sld [smem:[#allocation4 + $0x3]]
        %v318 = vstv %s317
        %v319 = vmul.f32 %v318, %v314
        %v320 = vmul.f32 %v318, %v315
        %v321 = vmul.f32 %v318, %v316
        %v322 = vadd.f32 %v311, %v319
        %v323 = vadd.f32 %v312, %v320
        %v324 = vadd.f32 %v313, %v321
        %s325 = sld [smem:[#allocation4 + $0x4]]
        %v326 = vstv %s325
        %v327 = vmul.f32 %v326, %v314
        %v328 = vmul.f32 %v326, %v315
        %v329 = vmul.f32 %v326, %v316
        %333 = vrot.lane.b32.xlu0 %v327, 127
        %v334 = vpop.permute.xlu0 %333
        %335 = vrot.lane.b32.xlu0 %v328, 127
        %v336 = vpop.permute.xlu0 %335
        %337 = vrot.lane.b32.xlu0 %v329, 127
        %v338 = vpop.permute.xlu0 %337
        %v342 = vadd.f32 %v322, %v334
        %v343 = vadd.f32 %v323, %v336
        %v344 = vadd.f32 %v324, %v338
        %s345 = sld [smem:[#allocation4 + $0x5]]
        %v346 = vstv %s345
        %v347 = vmul.f32 %v346, %v314
        %v348 = vmul.f32 %v346, %v315
        %v349 = vmul.f32 %v346, %v316
        %353 = vrot.lane.b32.xlu0 %v347, 126
        %v354 = vpop.permute.xlu0 %353
        %355 = vrot.lane.b32.xlu0 %v348, 126
        %v356 = vpop.permute.xlu0 %355
        %357 = vrot.lane.b32.xlu0 %v349, 126
        %v358 = vpop.permute.xlu0 %357
        %v362 = vadd.f32 %v342, %v354
        %v363 = vadd.f32 %v343, %v356
        %v364 = vadd.f32 %v344, %v358
        %v365 = vld [vmem:[%s262 + $0x2] sm:$0xff]
        %v366 = vld [vmem:[%s262 + $0xa] sm:$0xff]
        %v367 = vld [vmem:[%s262 + $0x12] sm:$0x3]
        %s368 = sld [smem:[#allocation4 + $0x6]]
        %v369 = vstv %s368
        %v370 = vmul.f32 %v369, %v365
        %v371 = vmul.f32 %v369, %v366
        %v372 = vmul.f32 %v369, %v367
        %v373 = vadd.f32 %v362, %v370
        %v374 = vadd.f32 %v363, %v371
        %v375 = vadd.f32 %v364, %v372
        %s376 = sld [smem:[#allocation4 + $0x7]]
        %v377 = vstv %s376
        %v378 = vmul.f32 %v377, %v365
        %v379 = vmul.f32 %v377, %v366
        %v380 = vmul.f32 %v377, %v367
        %384 = vrot.lane.b32.xlu0 %v378, 127
        %v385 = vpop.permute.xlu0 %384
        %386 = vrot.lane.b32.xlu0 %v379, 127
        %v387 = vpop.permute.xlu0 %386
        %388 = vrot.lane.b32.xlu0 %v380, 127
        %v389 = vpop.permute.xlu0 %388
        %v393 = vadd.f32 %v373, %v385
        %v394 = vadd.f32 %v374, %v387
        %v395 = vadd.f32 %v375, %v389
        %s396 = sld [smem:[#allocation4 + $0x8]]
        %v397 = vstv %s396
        %v398 = vmul.f32 %v397, %v365
        %v399 = vmul.f32 %v397, %v366
        %v400 = vmul.f32 %v397, %v367
        %404 = vrot.lane.b32.xlu0 %v398, 126
        %v405 = vpop.permute.xlu0 %404
        %406 = vrot.lane.b32.xlu0 %v399, 126
        %v407 = vpop.permute.xlu0 %406
        %408 = vrot.lane.b32.xlu0 %v400, 126
        %v409 = vpop.permute.xlu0 %408
        %v413 = vadd.f32 %v393, %v405
        %v414 = vadd.f32 %v394, %v407
        %v415 = vadd.f32 %v395, %v409
        %s416 = scalar_lea.vmem %s262, 24
        %v417 = vld [vmem:[%s416] sm:$0xff]
        %v418 = vld [vmem:[%s416 + $0x8] sm:$0xff]
        %v419 = vld [vmem:[%s416 + $0x10] sm:$0x3]
        %s420 = sld [smem:[#allocation4 + $0x9]]
        %v421 = vstv %s420
        %v422 = vmul.f32 %v421, %v417
        %v423 = vmul.f32 %v421, %v418
        %v424 = vmul.f32 %v421, %v419
        %v425 = vadd.f32 %v413, %v422
        %v426 = vadd.f32 %v414, %v423
        %v427 = vadd.f32 %v415, %v424
        %s428 = sld [smem:[#allocation4 + $0xa]]
        %v429 = vstv %s428
        %v430 = vmul.f32 %v429, %v417
        %v431 = vmul.f32 %v429, %v418
        %v432 = vmul.f32 %v429, %v419
        %436 = vrot.lane.b32.xlu0 %v430, 127
        %v437 = vpop.permute.xlu0 %436
        %438 = vrot.lane.b32.xlu0 %v431, 127
        %v439 = vpop.permute.xlu0 %438
        %440 = vrot.lane.b32.xlu0 %v432, 127
        %v441 = vpop.permute.xlu0 %440
        %v445 = vadd.f32 %v425, %v437
        %v446 = vadd.f32 %v426, %v439
        %v447 = vadd.f32 %v427, %v441
        %s448 = sld [smem:[#allocation4 + $0xb]]
        %v449 = vstv %s448
        %v450 = vmul.f32 %v449, %v417
        %v451 = vmul.f32 %v449, %v418
        %v452 = vmul.f32 %v449, %v419
        %456 = vrot.lane.b32.xlu0 %v450, 126
        %v457 = vpop.permute.xlu0 %456
        %458 = vrot.lane.b32.xlu0 %v451, 126
        %v459 = vpop.permute.xlu0 %458
        %460 = vrot.lane.b32.xlu0 %v452, 126
        %v461 = vpop.permute.xlu0 %460
        %v465 = vadd.f32 %v445, %v457
        %v466 = vadd.f32 %v446, %v459
        %v467 = vadd.f32 %v447, %v461
        %v468 = vld [vmem:[%s416 + $0x1] sm:$0xff]
        %v469 = vld [vmem:[%s416 + $0x9] sm:$0xff]
        %v470 = vld [vmem:[%s416 + $0x11] sm:$0x3]
        %s471 = sld [smem:[#allocation4 + $0xc]]
        %v472 = vstv %s471
        %v473 = vmul.f32 %v472, %v468
        %v474 = vmul.f32 %v472, %v469
        %v475 = vmul.f32 %v472, %v470
        %v476 = vadd.f32 %v465, %v473
        %v477 = vadd.f32 %v466, %v474
        %v478 = vadd.f32 %v467, %v475
        %s479 = sld [smem:[#allocation4 + $0xd]]
        %v480 = vstv %s479
        %v481 = vmul.f32 %v480, %v468
        %v482 = vmul.f32 %v480, %v469
        %v483 = vmul.f32 %v480, %v470
        %487 = vrot.lane.b32.xlu0 %v481, 127
        %v488 = vpop.permute.xlu0 %487
        %489 = vrot.lane.b32.xlu0 %v482, 127
        %v490 = vpop.permute.xlu0 %489
        %491 = vrot.lane.b32.xlu0 %v483, 127
        %v492 = vpop.permute.xlu0 %491
        %v496 = vadd.f32 %v476, %v488
        %v497 = vadd.f32 %v477, %v490
        %v498 = vadd.f32 %v478, %v492
        %s499 = sld [smem:[#allocation4 + $0xe]]
        %v500 = vstv %s499
        %v501 = vmul.f32 %v500, %v468
        %v502 = vmul.f32 %v500, %v469
        %v503 = vmul.f32 %v500, %v470
        %507 = vrot.lane.b32.xlu0 %v501, 126
        %v508 = vpop.permute.xlu0 %507
        %509 = vrot.lane.b32.xlu0 %v502, 126
        %v510 = vpop.permute.xlu0 %509
        %511 = vrot.lane.b32.xlu0 %v503, 126
        %v512 = vpop.permute.xlu0 %511
        %v516 = vadd.f32 %v496, %v508
        %v517 = vadd.f32 %v497, %v510
        %v518 = vadd.f32 %v498, %v512
        %v519 = vld [vmem:[%s416 + $0x2] sm:$0xff]
        %v520 = vld [vmem:[%s416 + $0xa] sm:$0xff]
        %v521 = vld [vmem:[%s416 + $0x12] sm:$0x3]
        %s522 = sld [smem:[#allocation4 + $0xf]]
        %v523 = vstv %s522
        %v524 = vmul.f32 %v523, %v519
        %v525 = vmul.f32 %v523, %v520
        %v526 = vmul.f32 %v523, %v521
        %v527 = vadd.f32 %v516, %v524
        %v528 = vadd.f32 %v517, %v525
        %v529 = vadd.f32 %v518, %v526
        %s530 = sld [smem:[#allocation4 + $0x10]]
        %v531 = vstv %s530
        %v532 = vmul.f32 %v531, %v519
        %v533 = vmul.f32 %v531, %v520
        %v534 = vmul.f32 %v531, %v521
        %538 = vrot.lane.b32.xlu0 %v532, 127
        %v539 = vpop.permute.xlu0 %538
        %540 = vrot.lane.b32.xlu0 %v533, 127
        %v541 = vpop.permute.xlu0 %540
        %542 = vrot.lane.b32.xlu0 %v534, 127
        %v543 = vpop.permute.xlu0 %542
        %v547 = vadd.f32 %v527, %v539
        %v548 = vadd.f32 %v528, %v541
        %v549 = vadd.f32 %v529, %v543
        %s550 = sld [smem:[#allocation4 + $0x11]]
        %v551 = vstv %s550
        %v552 = vmul.f32 %v551, %v519
        %v553 = vmul.f32 %v551, %v520
        %v554 = vmul.f32 %v551, %v521
        %558 = vrot.lane.b32.xlu0 %v552, 126
        %v559 = vpop.permute.xlu0 %558
        %560 = vrot.lane.b32.xlu0 %v553, 126
        %v561 = vpop.permute.xlu0 %560
        %562 = vrot.lane.b32.xlu0 %v554, 126
        %v563 = vpop.permute.xlu0 %562
        %v567 = vadd.f32 %v547, %v559
        %v568 = vadd.f32 %v548, %v561
        %v569 = vadd.f32 %v549, %v563
        %s570 = scalar_lea.vmem %s262, 48
        %v571 = vld [vmem:[%s570] sm:$0xff]
        %v572 = vld [vmem:[%s570 + $0x8] sm:$0xff]
        %v573 = vld [vmem:[%s570 + $0x10] sm:$0x3]
        %s574 = sld [smem:[#allocation4 + $0x12]]
        %v575 = vstv %s574
        %v576 = vmul.f32 %v575, %v571
        %v577 = vmul.f32 %v575, %v572
        %v578 = vmul.f32 %v575, %v573
        %v579 = vadd.f32 %v567, %v576
        %v580 = vadd.f32 %v568, %v577
        %v581 = vadd.f32 %v569, %v578
        %s582 = sld [smem:[#allocation4 + $0x13]]
        %v583 = vstv %s582
        %v584 = vmul.f32 %v583, %v571
        %v585 = vmul.f32 %v583, %v572
        %v586 = vmul.f32 %v583, %v573
        %590 = vrot.lane.b32.xlu0 %v584, 127
        %v591 = vpop.permute.xlu0 %590
        %592 = vrot.lane.b32.xlu0 %v585, 127
        %v593 = vpop.permute.xlu0 %592
        %594 = vrot.lane.b32.xlu0 %v586, 127
        %v595 = vpop.permute.xlu0 %594
        %v599 = vadd.f32 %v579, %v591
        %v600 = vadd.f32 %v580, %v593
        %v601 = vadd.f32 %v581, %v595
        %s602 = sld [smem:[#allocation4 + $0x14]]
        %v603 = vstv %s602
        %v604 = vmul.f32 %v603, %v571
        %v605 = vmul.f32 %v603, %v572
        %v606 = vmul.f32 %v603, %v573
        %610 = vrot.lane.b32.xlu0 %v604, 126
        %v611 = vpop.permute.xlu0 %610
        %612 = vrot.lane.b32.xlu0 %v605, 126
        %v613 = vpop.permute.xlu0 %612
        %614 = vrot.lane.b32.xlu0 %v606, 126
        %v615 = vpop.permute.xlu0 %614
        %v619 = vadd.f32 %v599, %v611
        %v620 = vadd.f32 %v600, %v613
        %v621 = vadd.f32 %v601, %v615
        %v622 = vld [vmem:[%s570 + $0x1] sm:$0xff]
        %v623 = vld [vmem:[%s570 + $0x9] sm:$0xff]
        %v624 = vld [vmem:[%s570 + $0x11] sm:$0x3]
        %s625 = sld [smem:[#allocation4 + $0x15]]
        %v626 = vstv %s625
        %v627 = vmul.f32 %v626, %v622
        %v628 = vmul.f32 %v626, %v623
        %v629 = vmul.f32 %v626, %v624
        %v630 = vadd.f32 %v619, %v627
        %v631 = vadd.f32 %v620, %v628
        %v632 = vadd.f32 %v621, %v629
        %s633 = sld [smem:[#allocation4 + $0x16]]
        %v634 = vstv %s633
        %v635 = vmul.f32 %v634, %v622
        %v636 = vmul.f32 %v634, %v623
        %v637 = vmul.f32 %v634, %v624
        %641 = vrot.lane.b32.xlu0 %v635, 127
        %v642 = vpop.permute.xlu0 %641
        %643 = vrot.lane.b32.xlu0 %v636, 127
        %v644 = vpop.permute.xlu0 %643
        %645 = vrot.lane.b32.xlu0 %v637, 127
        %v646 = vpop.permute.xlu0 %645
        %v650 = vadd.f32 %v630, %v642
        %v651 = vadd.f32 %v631, %v644
        %v652 = vadd.f32 %v632, %v646
        %s653 = sld [smem:[#allocation4 + $0x17]]
        %v654 = vstv %s653
        %v655 = vmul.f32 %v654, %v622
        %v656 = vmul.f32 %v654, %v623
        %v657 = vmul.f32 %v654, %v624
        %661 = vrot.lane.b32.xlu0 %v655, 126
        %v662 = vpop.permute.xlu0 %661
        %663 = vrot.lane.b32.xlu0 %v656, 126
        %v664 = vpop.permute.xlu0 %663
        %665 = vrot.lane.b32.xlu0 %v657, 126
        %v666 = vpop.permute.xlu0 %665
        %v670 = vadd.f32 %v650, %v662
        %v671 = vadd.f32 %v651, %v664
        %v672 = vadd.f32 %v652, %v666
        %v673 = vld [vmem:[%s570 + $0x2] sm:$0xff]
        %v674 = vld [vmem:[%s570 + $0xa] sm:$0xff]
        %v675 = vld [vmem:[%s570 + $0x12] sm:$0x3]
        %s676 = sld [smem:[#allocation4 + $0x18]]
        %v677 = vstv %s676
        %v678 = vmul.f32 %v677, %v673
        %v679 = vmul.f32 %v677, %v674
        %v680 = vmul.f32 %v677, %v675
        %v681 = vadd.f32 %v670, %v678
        %v682 = vadd.f32 %v671, %v679
        %v683 = vadd.f32 %v672, %v680
        %s684 = sld [smem:[#allocation4 + $0x19]]
        %v685 = vstv %s684
        %v686 = vmul.f32 %v685, %v673
        %v687 = vmul.f32 %v685, %v674
        %v688 = vmul.f32 %v685, %v675
        %692 = vrot.lane.b32.xlu0 %v686, 127
        %v693 = vpop.permute.xlu0 %692
        %694 = vrot.lane.b32.xlu0 %v687, 127
        %v695 = vpop.permute.xlu0 %694
        %696 = vrot.lane.b32.xlu0 %v688, 127
        %v697 = vpop.permute.xlu0 %696
        %v701 = vadd.f32 %v681, %v693
        %v702 = vadd.f32 %v682, %v695
        %v703 = vadd.f32 %v683, %v697
        %s704 = sld [smem:[#allocation4 + $0x1a]]
        %v705 = vstv %s704
        %v706 = vmul.f32 %v705, %v673
        %v707 = vmul.f32 %v705, %v674
        %v708 = vmul.f32 %v705, %v675
        %712 = vrot.lane.b32.xlu0 %v706, 126
        %v713 = vpop.permute.xlu0 %712
        %714 = vrot.lane.b32.xlu0 %v707, 126
        %v715 = vpop.permute.xlu0 %714
        %716 = vrot.lane.b32.xlu0 %v708, 126
        %v717 = vpop.permute.xlu0 %716
        %v721 = vadd.f32 %v701, %v713
        %v722 = vadd.f32 %v702, %v715
        %v723 = vadd.f32 %v703, %v717
        %s724 = sld [smem:[#allocation3]]
        %v725 = vstv %s724
        %v726 = vadd.f32 %v721, %v725
        %v727 = vadd.f32 %v722, %v725
        %v728 = vadd.f32 %v723, %v725
        %vm729 = vcmp.ge.f32.partialorder %v726, 0.0
        %vm730 = vcmp.ge.f32.partialorder %v727, 0.0
        %vm731 = vcmp.ge.f32.partialorder %v728, 0.0
        %v732 = vmul.f32 %v726, 0.2
        %v733 = vmul.f32 %v727, 0.2
        %v734 = vmul.f32 %v728, 0.2
        %v735 = vsel %vm729, %v726, %v732
        %v736 = vsel %vm730, %v727, %v733
        %v737 = vsel %vm731, %v728, %v734
        %v738 = vlaneseq
        %v739 = vshrl.u32 %v738, 7
        %v740 = vadd.s32 %v739, 8
        %v741 = vadd.s32 %v739, 16
        %v742 = vlaneseq
        %v743 = vand.u32 %v742, 127
        %vm744 = vcmp.ge.s32.totalorder %v739, 1
        %vm745 = vcmp.ge.s32.totalorder %v740, 1
        %vm746 = vcmp.ge.s32.totalorder %v741, 1
        %vm747 = vcmp.le.s32.totalorder %v739, 16
        %vm748 = vcmp.le.s32.totalorder %v740, 16
        %vm749 = vcmp.le.s32.totalorder %v741, 16
        %vm750 = vmand %vm744, %vm747
        %vm751 = vmand %vm745, %vm748
        %vm752 = vmand %vm746, %vm749
        %vm753 = vcmp.ge.s32.totalorder %v743, 1
        %vm754 = vmand %vm750, %vm753
        %vm755 = vmand %vm751, %vm753
        %vm756 = vmand %vm752, %vm753
        %vm757 = vcmp.le.s32.totalorder %v743, 16
        %vm758 = vmand %vm754, %vm757
        %vm759 = vmand %vm755, %vm757
        %vm760 = vmand %vm756, %vm757
        %v761 = vsel %vm758, %v735, 0.0
        %v762 = vsel %vm759, %v736, 0.0
        %v763 = vsel %vm760, %v737, 0.0
        %vm764 = vcmask 146432
        %765 = vst.msk [vmem:[#allocation2] sm:$0xff] %vm764, %v761
        %766 = vst.msk [vmem:[#allocation2 + $0x8] sm:$0xff] %vm764, %v762
        %vm767 = vcmask 140288
        %768 = vst.msk [vmem:[#allocation2 + $0x10] sm:$0x3] %vm767, %v763
        %v769 = vld [vmem:[#allocation2] sm:$0xff]
        %v770 = vld [vmem:[#allocation2 + $0x8] sm:$0xff]
        %v771 = vld [vmem:[#allocation2 + $0x1] sm:$0xff]
        %v772 = vld [vmem:[#allocation2 + $0x9] sm:$0xff]
        %v773 = vld [vmem:[#allocation2 + $0x2] sm:$0xff]
        %v774 = vld [vmem:[#allocation2 + $0xa] sm:$0xff]
        %s775 = sld [smem:[#allocation7]]
        %v776 = vstv %s775
        %v777 = vmul.f32 %v776, %v769
        %v778 = vmul.f32 %v776, %v770
        %v779 = vadd.f32 %v777, 0.0
        %v780 = vadd.f32 %v778, 0.0
        %s781 = sld [smem:[#allocation7 + $0x1]]
        %v782 = vstv %s781
        %v783 = vmul.f32 %v782, %v769
        %v784 = vmul.f32 %v782, %v770
        %787 = vrot.lane.b32.xlu0 %v783, 127
        %v788 = vpop.permute.xlu0 %787
        %789 = vrot.lane.b32.xlu0 %v784, 127
        %v790 = vpop.permute.xlu0 %789
        %v793 = vadd.f32 %v779, %v788
        %v794 = vadd.f32 %v780, %v790
        %s795 = sld [smem:[#allocation7 + $0x2]]
        %v796 = vstv %s795
        %v797 = vmul.f32 %v796, %v769
        %v798 = vmul.f32 %v796, %v770
        %801 = vrot.lane.b32.xlu0 %v797, 126
        %v802 = vpop.permute.xlu0 %801
        %803 = vrot.lane.b32.xlu0 %v798, 126
        %v804 = vpop.permute.xlu0 %803
        %v807 = vadd.f32 %v793, %v802
        %v808 = vadd.f32 %v794, %v804
        %s809 = sld [smem:[#allocation7 + $0x3]]
        %v810 = vstv %s809
        %v811 = vmul.f32 %v810, %v771
        %v812 = vmul.f32 %v810, %v772
        %v813 = vadd.f32 %v807, %v811
        %v814 = vadd.f32 %v808, %v812
        %s815 = sld [smem:[#allocation7 + $0x4]]
        %v816 = vstv %s815
        %v817 = vmul.f32 %v816, %v771
        %v818 = vmul.f32 %v816, %v772
        %821 = vrot.lane.b32.xlu0 %v817, 127
        %v822 = vpop.permute.xlu0 %821
        %823 = vrot.lane.b32.xlu0 %v818, 127
        %v824 = vpop.permute.xlu0 %823
        %v827 = vadd.f32 %v813, %v822
        %v828 = vadd.f32 %v814, %v824
        %s829 = sld [smem:[#allocation7 + $0x5]]
        %v830 = vstv %s829
        %v831 = vmul.f32 %v830, %v771
        %v832 = vmul.f32 %v830, %v772
        %835 = vrot.lane.b32.xlu0 %v831, 126
        %v836 = vpop.permute.xlu0 %835
        %837 = vrot.lane.b32.xlu0 %v832, 126
        %v838 = vpop.permute.xlu0 %837
        %v841 = vadd.f32 %v827, %v836
        %v842 = vadd.f32 %v828, %v838
        %s843 = sld [smem:[#allocation7 + $0x6]]
        %v844 = vstv %s843
        %v845 = vmul.f32 %v844, %v773
        %v846 = vmul.f32 %v844, %v774
        %v847 = vadd.f32 %v841, %v845
        %v848 = vadd.f32 %v842, %v846
        %s849 = sld [smem:[#allocation7 + $0x7]]
        %v850 = vstv %s849
        %v851 = vmul.f32 %v850, %v773
        %v852 = vmul.f32 %v850, %v774
        %855 = vrot.lane.b32.xlu0 %v851, 127
        %v856 = vpop.permute.xlu0 %855
        %857 = vrot.lane.b32.xlu0 %v852, 127
        %v858 = vpop.permute.xlu0 %857
        %v861 = vadd.f32 %v847, %v856
        %v862 = vadd.f32 %v848, %v858
        %s863 = sld [smem:[#allocation7 + $0x8]]
        %v864 = vstv %s863
        %v865 = vmul.f32 %v864, %v773
        %v866 = vmul.f32 %v864, %v774
        %869 = vrot.lane.b32.xlu0 %v865, 126
        %v870 = vpop.permute.xlu0 %869
        %871 = vrot.lane.b32.xlu0 %v866, 126
        %v872 = vpop.permute.xlu0 %871
        %v875 = vadd.f32 %v861, %v870
        %v876 = vadd.f32 %v862, %v872
        %s877 = sld [smem:[#allocation9]]
        %v878 = vstv %s877
        %v879 = vadd.f32 %v875, %v878
        %v880 = vadd.f32 %v876, %v878
        %vm881 = vcmask 130048
        %882 = vst.msk [vmem:[%s257] sm:$0xff] %vm881, %v879
        %883 = vst.msk [vmem:[%s257 + $0x8] sm:$0xff] %vm881, %v880
        %s884 = sld [smem:[#allocation7 + $0x9]]
        %v885 = vstv %s884
        %v886 = vmul.f32 %v885, %v769
        %v887 = vmul.f32 %v885, %v770
        %v888 = vadd.f32 %v886, 0.0
        %v889 = vadd.f32 %v887, 0.0
        %s890 = sld [smem:[#allocation7 + $0xa]]
        %v891 = vstv %s890
        %v892 = vmul.f32 %v891, %v769
        %v893 = vmul.f32 %v891, %v770
        %896 = vrot.lane.b32.xlu0 %v892, 127
        %v897 = vpop.permute.xlu0 %896
        %898 = vrot.lane.b32.xlu0 %v893, 127
        %v899 = vpop.permute.xlu0 %898
        %v902 = vadd.f32 %v888, %v897
        %v903 = vadd.f32 %v889, %v899
        %s904 = sld [smem:[#allocation7 + $0xb]]
        %v905 = vstv %s904
        %v906 = vmul.f32 %v905, %v769
        %v907 = vmul.f32 %v905, %v770
        %910 = vrot.lane.b32.xlu0 %v906, 126
        %v911 = vpop.permute.xlu0 %910
        %912 = vrot.lane.b32.xlu0 %v907, 126
        %v913 = vpop.permute.xlu0 %912
        %v916 = vadd.f32 %v902, %v911
        %v917 = vadd.f32 %v903, %v913
        %s918 = sld [smem:[#allocation7 + $0xc]]
        %v919 = vstv %s918
        %v920 = vmul.f32 %v919, %v771
        %v921 = vmul.f32 %v919, %v772
        %v922 = vadd.f32 %v916, %v920
        %v923 = vadd.f32 %v917, %v921
        %s924 = sld [smem:[#allocation7 + $0xd]]
        %v925 = vstv %s924
        %v926 = vmul.f32 %v925, %v771
        %v927 = vmul.f32 %v925, %v772
        %930 = vrot.lane.b32.xlu0 %v926, 127
        %v931 = vpop.permute.xlu0 %930
        %932 = vrot.lane.b32.xlu0 %v927, 127
        %v933 = vpop.permute.xlu0 %932
        %v936 = vadd.f32 %v922, %v931
        %v937 = vadd.f32 %v923, %v933
        %s938 = sld [smem:[#allocation7 + $0xe]]
        %v939 = vstv %s938
        %v940 = vmul.f32 %v939, %v771
        %v941 = vmul.f32 %v939, %v772
        %944 = vrot.lane.b32.xlu0 %v940, 126
        %v945 = vpop.permute.xlu0 %944
        %946 = vrot.lane.b32.xlu0 %v941, 126
        %v947 = vpop.permute.xlu0 %946
        %v950 = vadd.f32 %v936, %v945
        %v951 = vadd.f32 %v937, %v947
        %s952 = sld [smem:[#allocation7 + $0xf]]
        %v953 = vstv %s952
        %v954 = vmul.f32 %v953, %v773
        %v955 = vmul.f32 %v953, %v774
        %v956 = vadd.f32 %v950, %v954
        %v957 = vadd.f32 %v951, %v955
        %s958 = sld [smem:[#allocation7 + $0x10]]
        %v959 = vstv %s958
        %v960 = vmul.f32 %v959, %v773
        %v961 = vmul.f32 %v959, %v774
        %964 = vrot.lane.b32.xlu0 %v960, 127
        %v965 = vpop.permute.xlu0 %964
        %966 = vrot.lane.b32.xlu0 %v961, 127
        %v967 = vpop.permute.xlu0 %966
        %v970 = vadd.f32 %v956, %v965
        %v971 = vadd.f32 %v957, %v967
        %s972 = sld [smem:[#allocation7 + $0x11]]
        %v973 = vstv %s972
        %v974 = vmul.f32 %v973, %v773
        %v975 = vmul.f32 %v973, %v774
        %978 = vrot.lane.b32.xlu0 %v974, 126
        %v979 = vpop.permute.xlu0 %978
        %980 = vrot.lane.b32.xlu0 %v975, 126
        %v981 = vpop.permute.xlu0 %980
        %v984 = vadd.f32 %v970, %v979
        %v985 = vadd.f32 %v971, %v981
        %s986 = sld [smem:[#allocation9 + $0x1]]
        %v987 = vstv %s986
        %v988 = vadd.f32 %v984, %v987
        %v989 = vadd.f32 %v985, %v987
        %s990 = scalar_lea.vmem %s257, 16 [#allocation10]
        %991 = vst.msk [vmem:[%s990] sm:$0xff] %vm881, %v988
        %992 = vst.msk [vmem:[%s990 + $0x8] sm:$0xff] %vm881, %v989
        %s993 = sld [smem:[#allocation7 + $0x12]]
        %v994 = vstv %s993
        %v995 = vmul.f32 %v994, %v769
        %v996 = vmul.f32 %v994, %v770
        %v997 = vadd.f32 %v995, 0.0
        %v998 = vadd.f32 %v996, 0.0
        %s999 = sld [smem:[#allocation7 + $0x13]]
        %v1000 = vstv %s999
        %v1001 = vmul.f32 %v1000, %v769
        %v1002 = vmul.f32 %v1000, %v770
        %1005 = vrot.lane.b32.xlu0 %v1001, 127
        %v1006 = vpop.permute.xlu0 %1005
        %1007 = vrot.lane.b32.xlu0 %v1002, 127
        %v1008 = vpop.permute.xlu0 %1007
        %v1011 = vadd.f32 %v997, %v1006
        %v1012 = vadd.f32 %v998, %v1008
        %s1013 = sld [smem:[#allocation7 + $0x14]]
        %v1014 = vstv %s1013
        %v1015 = vmul.f32 %v1014, %v769
        %v1016 = vmul.f32 %v1014, %v770
        %1019 = vrot.lane.b32.xlu0 %v1015, 126
        %v1020 = vpop.permute.xlu0 %1019
        %1021 = vrot.lane.b32.xlu0 %v1016, 126
        %v1022 = vpop.permute.xlu0 %1021
        %v1025 = vadd.f32 %v1011, %v1020
        %v1026 = vadd.f32 %v1012, %v1022
        %s1027 = sld [smem:[#allocation7 + $0x15]]
        %v1028 = vstv %s1027
        %v1029 = vmul.f32 %v1028, %v771
        %v1030 = vmul.f32 %v1028, %v772
        %v1031 = vadd.f32 %v1025, %v1029
        %v1032 = vadd.f32 %v1026, %v1030
        %s1033 = sld [smem:[#allocation7 + $0x16]]
        %v1034 = vstv %s1033
        %v1035 = vmul.f32 %v1034, %v771
        %v1036 = vmul.f32 %v1034, %v772
        %1039 = vrot.lane.b32.xlu0 %v1035, 127
        %v1040 = vpop.permute.xlu0 %1039
        %1041 = vrot.lane.b32.xlu0 %v1036, 127
        %v1042 = vpop.permute.xlu0 %1041
        %v1045 = vadd.f32 %v1031, %v1040
        %v1046 = vadd.f32 %v1032, %v1042
        %s1047 = sld [smem:[#allocation7 + $0x17]]
        %v1048 = vstv %s1047
        %v1049 = vmul.f32 %v1048, %v771
        %v1050 = vmul.f32 %v1048, %v772
        %1053 = vrot.lane.b32.xlu0 %v1049, 126
        %v1054 = vpop.permute.xlu0 %1053
        %1055 = vrot.lane.b32.xlu0 %v1050, 126
        %v1056 = vpop.permute.xlu0 %1055
        %v1059 = vadd.f32 %v1045, %v1054
        %v1060 = vadd.f32 %v1046, %v1056
        %s1061 = sld [smem:[#allocation7 + $0x18]]
        %v1062 = vstv %s1061
        %v1063 = vmul.f32 %v1062, %v773
        %v1064 = vmul.f32 %v1062, %v774
        %v1065 = vadd.f32 %v1059, %v1063
        %v1066 = vadd.f32 %v1060, %v1064
        %s1067 = sld [smem:[#allocation7 + $0x19]]
        %v1068 = vstv %s1067
        %v1069 = vmul.f32 %v1068, %v773
        %v1070 = vmul.f32 %v1068, %v774
        %1073 = vrot.lane.b32.xlu0 %v1069, 127
        %v1074 = vpop.permute.xlu0 %1073
        %1075 = vrot.lane.b32.xlu0 %v1070, 127
        %v1076 = vpop.permute.xlu0 %1075
        %v1079 = vadd.f32 %v1065, %v1074
        %v1080 = vadd.f32 %v1066, %v1076
        %s1081 = sld [smem:[#allocation7 + $0x1a]]
        %v1082 = vstv %s1081
        %v1083 = vmul.f32 %v1082, %v773
        %v1084 = vmul.f32 %v1082, %v774
        %1087 = vrot.lane.b32.xlu0 %v1083, 126
        %v1088 = vpop.permute.xlu0 %1087
        %1089 = vrot.lane.b32.xlu0 %v1084, 126
        %v1090 = vpop.permute.xlu0 %1089
        %v1093 = vadd.f32 %v1079, %v1088
        %v1094 = vadd.f32 %v1080, %v1090
        %s1095 = sld [smem:[#allocation9 + $0x2]]
        %v1096 = vstv %s1095
        %v1097 = vadd.f32 %v1093, %v1096
        %v1098 = vadd.f32 %v1094, %v1096
        %s1099 = scalar_lea.vmem %s257, 32 [#allocation10]
        %1100 = vst.msk [vmem:[%s1099] sm:$0xff] %vm881, %v1097
        %1101 = vst.msk [vmem:[%s1099 + $0x8] sm:$0xff] %vm881, %v1098
        %s1102 = sand.u32 %s140, 1
        %s1103 = scalar_lea.sflag [#allocation5], %s1102
        %s1104 = sand.u32 %s140, 1
        %s1105 = smul.addr %s1104, 48
        %s1106 = scalar_lea.vmem [#allocation10], %s1105
        // Predicated region
        $region53: #{img_g_forward.1} parent=39 // pred_check
          %p1107 = pneg %p150
        $region54: #{img_g_forward.1} parent=39 // pred_check_branch
          %1109 = sbr.rel (%p1107) target = $region56
        $region55: #{img_g_forward.1} parent=39 // pred_region
          %s1111 = ssub.s32 768, 768
          %1112 = vsyncadd %s1103, %s1111
          %s1113 = smul.addr %s22, 6
          %s1114 = smul.addr %s1113, 128
          %s1115 = scalar_lea.hbm %s5, %s1114
          %s1116 = sshll.u32 %s1106, 4
          %s1117 = int_to_ptr.vmem [resolvable:$true] %s1116
          %1122 = dma.vmem_to_hbm [thread:$0]  %s1117, 768, %s1115, %s1103, 128, 128, 8
        $region56: #{img_g_forward.1} parent=39 // pred_fallthru
          _
      $region40: #{img_g_forward.1} parent=5 // pred_fallthru
        _
      %p1123 = scmp.le.s32.totalorder 2, %s17
      // Predicated region
      $region57: #{img_g_forward.1} parent=5 // pred_check
        %p1124 = pneg %p1123
      $region58: #{img_g_forward.1} parent=5 // pred_check_branch
        %1126 = sbr.rel (%p1124) target = $region60
      $region59: #{img_g_forward.1} parent=5 // pred_region
        %s1127 = ssub.s32 %s17, 2
        // Predicated region
        $region61: #{img_g_forward.1} parent=59 // pred_check
          %p1128 = pneg %p156
        $region62: #{img_g_forward.1} parent=59 // pred_check_branch
          %1130 = sbr.rel (%p1128) target = $region64
        $region63: #{img_g_forward.1} parent=59 // pred_region
          %s1131 = sand.u32 %s141, 1
          %s1132 = scalar_lea.sflag [#allocation5], %s1131
          %s1133 = sand.u32 %s141, 1
          %s1134 = smul.addr %s1133, 48
          %s1135 = scalar_lea.vmem [#allocation10], %s1134
          %1136 = dma.done %s1132, 768
        $region64: #{img_g_forward.1} parent=59 // pred_fallthru
          _
      $region60: #{img_g_forward.1} parent=5 // pred_fallthru
        _
    $region6: #{img_g_forward.1} parent=1 // loop_footer
      %s21 = sadd.s32 1, %s17
    $region7: #{img_g_forward.1} parent=1 // loop_footer_branch
      %16 = sbr.rel target = $region3
    $region8: #{img_g_forward.1} parent=1 // loop_exit
      _
    %1137 = vsyncpa [#allocation5], 1
    %s1138 = scalar_lea.sflag [#allocation5], 1
    %1139 = vsyncpa %s1138, 1
    %1140 = vsyncpa [#allocation6], 1
    %s1141 = scalar_lea.sflag [#allocation6], 1
    %1142 = vsyncpa %s1141, 1
    %1143 = vsyncpa [#allocation8], 1

</llo_original>
